<compile_context>
chip_gen: v7x
topology: tpu7x:2x2x1
jax: 0.10.0
libtpu: 0.0.40
codegen_flags: <defaults>
</compile_context>

<pallas_src>
import jax
import jax.numpy as jnp
from jax.experimental import pallas as pl
from jax.experimental.pallas import tpu as pltpu


def gru_kernel(x_ref, wih_ref, whh_ref, bih_ref, bhh_ref, hout_ref, gi_ref):
    """Refs:
       x_ref   : (T*Bp, E)  bf16  time-major flattened embeddings
       wih_ref : (E, 3H)    bf16  W_ih^T
       whh_ref : (H, 3H)    bf16  W_hh^T
       bih_ref : (1, 3H)    f32
       bhh_ref : (1, 3H)    f32
       hout_ref: (Bp, H)    f32   output: last hidden state h_T
       gi_ref  : (T*Bp, 3H) f32   scratch: precomputed input gates
    """
    b_pad, hidden = hout_ref.shape
    n_steps = gi_ref.shape[0] // b_pad

    # ---- Phase 0: input projection for every timestep in one MXU matmul ----
    # (no time dependence -> hoisted off the serial critical path)
    gi_ref[...] = (
        jnp.dot(x_ref[...], wih_ref[...], preferred_element_type=jnp.float32)
        + bih_ref[...]
    )

    # Hoist loop-invariant loads / broadcasts out of the recurrence.
    whh = whh_ref[...]                                          # bf16, resident
    bhh = jnp.broadcast_to(bhh_ref[...], (b_pad, 3 * hidden))   # f32, hoisted

    # ---- Phase 1: serial GRU recurrence (PyTorch gate order: r, z, n) ----
    def step(t, h_prev):
        row = pl.multiple_of(t * b_pad, b_pad)
        gi_t = gi_ref[pl.ds(row, b_pad), :]                      # (Bp, 3H) f32
        gh = (
            jnp.dot(h_prev.astype(jnp.bfloat16), whh,
                    preferred_element_type=jnp.float32)
            + bhh
        )
        i_r = gi_t[:, 0:hidden]
        i_z = gi_t[:, hidden:2 * hidden]
        i_n = gi_t[:, 2 * hidden:3 * hidden]
        h_r = gh[:, 0:hidden]
        h_z = gh[:, hidden:2 * hidden]
        h_n = gh[:, 2 * hidden:3 * hidden]
        r = jax.nn.sigmoid(i_r + h_r)
        z = jax.nn.sigmoid(i_z + h_z)
        n = jnp.tanh(i_n + r * h_n)
        return (1.0 - z) * n + z * h_prev                        # f32 carry

    h0 = jnp.zeros((b_pad, hidden), jnp.float32)
    h_last = jax.lax.fori_loop(0, n_steps, step, h0, unroll=True)
    hout_ref[...] = h_last                                       # lane-dense (Bp, H)


def gru_classifier_forward(tokens, emb_table, w_ih, w_hh, b_ih, b_hh, w_out, b_out):
    """tokens: (B, T) int32.  Returns sigmoid logits (B, 1) float32."""
    B, T = tokens.shape
    E = emb_table.shape[1]
    H = w_hh.shape[1]                      # w_hh: (3H, H)  -> H (bug fix)
    B_pad = max(8, ((B + 7) // 8) * 8)     # pad batch to the f32 sublane count

    # Embedding lookup (gather) is plain-JAX glue; padding_idx=0 -> zero row 0.
    embeds = jnp.take(emb_table, tokens, axis=0)            # (B, T, E)
    embeds = jnp.transpose(embeds, (1, 0, 2))               # (T, B, E) time-major
    if B_pad != B:
        embeds = jnp.pad(embeds, ((0, 0), (0, B_pad - B), (0, 0)))
    x_flat = embeds.reshape(T * B_pad, E).astype(jnp.bfloat16)

    # Transposed weights so the kernel does x @ W (bf16 MXU operands).
    wih_t = w_ih.T.astype(jnp.bfloat16)                     # (E, 3H)
    whh_t = w_hh.T.astype(jnp.bfloat16)                     # (H, 3H)
    bih2 = b_ih.reshape(1, 3 * H).astype(jnp.float32)
    bhh2 = b_hh.reshape(1, 3 * H).astype(jnp.float32)

    h_last = pl.pallas_call(
        gru_kernel,
        out_shape=jax.ShapeDtypeStruct((B_pad, H), jnp.float32),
        in_specs=[pl.BlockSpec(memory_space=pltpu.MemorySpace.VMEM)] * 5,
        out_specs=pl.BlockSpec(memory_space=pltpu.MemorySpace.VMEM),
        scratch_shapes=[pltpu.VMEM((T * B_pad, 3 * H), jnp.float32)],
    )(x_flat, wih_t, whh_t, bih2, bhh2)

    h_last = h_last[:B]                                     # drop batch padding
    # Tiny (H,1) classifier head + sigmoid kept in the wrapper (per perf
    # guidance: keeps the kernel output lane-dense; this op is negligible).
    return jax.nn.sigmoid(h_last @ w_out.T + b_out)


def reference_forward(tokens, emb_table, w_ih, w_hh, b_ih, b_hh, w_out, b_out):
    """Pure-JAX f32 reference implementing PyTorch GRU semantics."""
    B, T = tokens.shape
    H = w_hh.shape[1]
    embeds = jnp.take(emb_table, tokens, axis=0)            # (B, T, E)

    def step(h, x_t):
        gi = x_t @ w_ih.T + b_ih
        gh = h @ w_hh.T + b_hh
        i_r, i_z, i_n = jnp.split(gi, 3, axis=-1)
        h_r, h_z, h_n = jnp.split(gh, 3, axis=-1)
        r = jax.nn.sigmoid(i_r + h_r)
        z = jax.nn.sigmoid(i_z + h_z)
        n = jnp.tanh(i_n + r * h_n)
        h_new = (1.0 - z) * n + z * h
        return h_new, None

    h0 = jnp.zeros((B, H), jnp.float32)
    h_last, _ = jax.lax.scan(step, h0, jnp.transpose(embeds, (1, 0, 2)))
    return jax.nn.sigmoid(h_last @ w_out.T + b_out)


if __name__ == "__main__":
    # Small shapes consistent with the module's forward.
    vocab_size = 50
    embedding_dim = 128     # E
    hidden_dim = 256        # H
    output_size = 1
    batch = 2               # B
    seq_len = 8             # T

    key = jax.random.PRNGKey(0)
    k_emb, k_wih, k_whh, k_bih, k_bhh, k_wo, k_bo, k_tok = jax.random.split(key, 8)

    emb_table = jax.random.normal(k_emb, (vocab_size, embedding_dim), jnp.float32) * 0.1
    emb_table = emb_table.at[0].set(0.0)   # padding_idx=0

    w_ih = jax.random.normal(k_wih, (3 * hidden_dim, embedding_dim), jnp.float32) * 0.05
    w_hh = jax.random.normal(k_whh, (3 * hidden_dim, hidden_dim), jnp.float32) * 0.05
    b_ih = jax.random.normal(k_bih, (3 * hidden_dim,), jnp.float32) * 0.05
    b_hh = jax.random.normal(k_bhh, (3 * hidden_dim,), jnp.float32) * 0.05
    w_out = jax.random.normal(k_wo, (output_size, hidden_dim), jnp.float32) * 0.05
    b_out = jax.random.normal(k_bo, (output_size,), jnp.float32) * 0.05

    tokens = jax.random.randint(k_tok, (batch, seq_len), 0, vocab_size, dtype=jnp.int32)

    out = gru_classifier_forward(tokens, emb_table, w_ih, w_hh, b_ih, b_hh, w_out, b_out)
    out = jax.block_until_ready(out)

    ref = reference_forward(tokens, emb_table, w_ih, w_hh, b_ih, b_hh, w_out, b_out)
    assert out.shape == (batch, output_size)
    # bf16 matmul operands (f32 accumulation) -> allow a modest tolerance.
    assert jnp.allclose(out, ref, atol=2e-2, rtol=0.0), (out, ref)

    print("KERNEL_OK")
</pallas_src>

<mosaic_0001>
module attributes {stable_mosaic.version = 11 : i64} {
  func.func @gru_kernel(%arg0: memref<64x128xbf16, #tpu.memory_space<vmem>>, %arg1: memref<128x768xbf16, #tpu.memory_space<vmem>>, %arg2: memref<256x768xbf16, #tpu.memory_space<vmem>>, %arg3: memref<1x768xf32, #tpu.memory_space<vmem>>, %arg4: memref<1x768xf32, #tpu.memory_space<vmem>>, %arg5: memref<8x256xf32, #tpu.memory_space<vmem>>, %arg6: memref<64x768xf32, #tpu.memory_space<vmem>>) attributes {dimension_semantics = [], scalar_prefetch = 0 : i64, scratch_operands = 1 : i64, tpu.core_type = #tpu.core_type<tc>} {
    %c0 = arith.constant 0 : index
    %c0_0 = arith.constant 0 : index
    %0 = vector.load %arg0[%c0, %c0_0] : memref<64x128xbf16, #tpu.memory_space<vmem>>, vector<64x128xbf16>
    %c0_1 = arith.constant 0 : index
    %c0_2 = arith.constant 0 : index
    %1 = vector.load %arg1[%c0_1, %c0_2] : memref<128x768xbf16, #tpu.memory_space<vmem>>, vector<128x768xbf16>
    %cst = arith.constant dense<0.000000e+00> : vector<64x768xf32>
    %2 = tpu.matmul %0, %1, %cst {dimension_numbers = #tpu.dot_dimension_numbers<[1], [0], [0], [1], [0, 0, 1, 1], [], []>} : vector<64x128xbf16>, vector<128x768xbf16>, vector<64x768xf32> -> vector<64x768xf32>
    %c0_3 = arith.constant 0 : index
    %c0_4 = arith.constant 0 : index
    %3 = vector.load %arg3[%c0_3, %c0_4] : memref<1x768xf32, #tpu.memory_space<vmem>>, vector<1x768xf32>
    %4 = vector.broadcast %3 : vector<1x768xf32> to vector<64x768xf32>
    %5 = arith.addf %2, %4 : vector<64x768xf32>
    %c0_5 = arith.constant 0 : index
    %c0_6 = arith.constant 0 : index
    %6 = vector.load %arg6[%c0_5, %c0_6] : memref<64x768xf32, #tpu.memory_space<vmem>>, vector<64x768xf32>
    tpu.vector_store %arg6[%c0_5, %c0_6], %5 {strides = array<i32>} : memref<64x768xf32, #tpu.memory_space<vmem>>, vector<64x768xf32>,
    %c0_7 = arith.constant 0 : index
    %c0_8 = arith.constant 0 : index
    %7 = vector.load %arg2[%c0_7, %c0_8] : memref<256x768xbf16, #tpu.memory_space<vmem>>, vector<256x768xbf16>
    %c0_9 = arith.constant 0 : index
    %c0_10 = arith.constant 0 : index
    %8 = vector.load %arg4[%c0_9, %c0_10] : memref<1x768xf32, #tpu.memory_space<vmem>>, vector<1x768xf32>
    %9 = vector.shape_cast %8 : vector<1x768xf32> to vector<1x768xf32>
    %10 = vector.broadcast %9 : vector<1x768xf32> to vector<8x768xf32>
    %cst_11 = arith.constant 0.000000e+00 : f32
    %11 = vector.broadcast %cst_11 : f32 to vector<8x256xf32>
    %c0_i32 = arith.constant 0 : i32
    %c8_i32 = arith.constant 8 : i32
    %12 = arith.muli %c0_i32, %c8_i32 : i32
    %13 = tpu.assume_multiple %12, 8 : i32
    %14 = arith.index_cast %13 : i32 to index
    %c0_12 = arith.constant 0 : index
    %15 = vector.load %arg6[%14, %c0_12] : memref<64x768xf32, #tpu.memory_space<vmem>>, vector<8x768xf32>
    %16 = arith.truncf %11 : vector<8x256xf32> to vector<8x256xbf16>
    %cst_13 = arith.constant dense<0.000000e+00> : vector<8x768xf32>
    %17 = tpu.matmul %16, %7, %cst_13 {dimension_numbers = #tpu.dot_dimension_numbers<[1], [0], [0], [1], [0, 0, 1, 1], [], []>} : vector<8x256xbf16>, vector<256x768xbf16>, vector<8x768xf32> -> vector<8x768xf32>
    %18 = arith.addf %17, %10 : vector<8x768xf32>
    %19 = vector.extract_strided_slice %15 {offsets = [0, 0], sizes = [8, 256], strides = [1, 1]} : vector<8x768xf32> to vector<8x256xf32>
    %20 = vector.extract_strided_slice %15 {offsets = [0, 256], sizes = [8, 256], strides = [1, 1]} : vector<8x768xf32> to vector<8x256xf32>
    %21 = vector.extract_strided_slice %15 {offsets = [0, 512], sizes = [8, 256], strides = [1, 1]} : vector<8x768xf32> to vector<8x256xf32>
    %22 = vector.extract_strided_slice %18 {offsets = [0, 0], sizes = [8, 256], strides = [1, 1]} : vector<8x768xf32> to vector<8x256xf32>
    %23 = vector.extract_strided_slice %18 {offsets = [0, 256], sizes = [8, 256], strides = [1, 1]} : vector<8x768xf32> to vector<8x256xf32>
    %24 = vector.extract_strided_slice %18 {offsets = [0, 512], sizes = [8, 256], strides = [1, 1]} : vector<8x768xf32> to vector<8x256xf32>
    %25 = arith.addf %19, %22 : vector<8x256xf32>
    %26 = arith.negf %25 : vector<8x256xf32>
    %27 = math.exp %26 : vector<8x256xf32>
    %cst_14 = arith.constant 1.000000e+00 : f32
    %28 = vector.broadcast %cst_14 : f32 to vector<8x256xf32>
    %29 = arith.addf %28, %27 : vector<8x256xf32>
    %30 = arith.divf %28, %29 : vector<8x256xf32>
    %31 = arith.addf %20, %23 : vector<8x256xf32>
    %32 = arith.negf %31 : vector<8x256xf32>
    %33 = math.exp %32 : vector<8x256xf32>
    %cst_15 = arith.constant 1.000000e+00 : f32
    %34 = vector.broadcast %cst_15 : f32 to vector<8x256xf32>
    %35 = arith.addf %34, %33 : vector<8x256xf32>
    %36 = arith.divf %34, %35 : vector<8x256xf32>
    %37 = arith.mulf %30, %24 : vector<8x256xf32>
    %38 = arith.addf %21, %37 : vector<8x256xf32>
    %39 = math.tanh %38 : vector<8x256xf32>
    %cst_16 = arith.constant 1.000000e+00 : f32
    %40 = vector.broadcast %cst_16 : f32 to vector<8x256xf32>
    %41 = arith.subf %40, %36 : vector<8x256xf32>
    %42 = arith.mulf %41, %39 : vector<8x256xf32>
    %43 = arith.mulf %36, %11 : vector<8x256xf32>
    %44 = arith.addf %42, %43 : vector<8x256xf32>
    %c1_i32 = arith.constant 1 : i32
    %c8_i32_17 = arith.constant 8 : i32
    %45 = arith.muli %c1_i32, %c8_i32_17 : i32
    %46 = tpu.assume_multiple %45, 8 : i32
    %47 = arith.index_cast %46 : i32 to index
    %c0_18 = arith.constant 0 : index
    %48 = vector.load %arg6[%47, %c0_18] : memref<64x768xf32, #tpu.memory_space<vmem>>, vector<8x768xf32>
    %49 = arith.truncf %44 : vector<8x256xf32> to vector<8x256xbf16>
    %cst_19 = arith.constant dense<0.000000e+00> : vector<8x768xf32>
    %50 = tpu.matmul %49, %7, %cst_19 {dimension_numbers = #tpu.dot_dimension_numbers<[1], [0], [0], [1], [0, 0, 1, 1], [], []>} : vector<8x256xbf16>, vector<256x768xbf16>, vector<8x768xf32> -> vector<8x768xf32>
    %51 = arith.addf %50, %10 : vector<8x768xf32>
    %52 = vector.extract_strided_slice %48 {offsets = [0, 0], sizes = [8, 256], strides = [1, 1]} : vector<8x768xf32> to vector<8x256xf32>
    %53 = vector.extract_strided_slice %48 {offsets = [0, 256], sizes = [8, 256], strides = [1, 1]} : vector<8x768xf32> to vector<8x256xf32>
    %54 = vector.extract_strided_slice %48 {offsets = [0, 512], sizes = [8, 256], strides = [1, 1]} : vector<8x768xf32> to vector<8x256xf32>
    %55 = vector.extract_strided_slice %51 {offsets = [0, 0], sizes = [8, 256], strides = [1, 1]} : vector<8x768xf32> to vector<8x256xf32>
    %56 = vector.extract_strided_slice %51 {offsets = [0, 256], sizes = [8, 256], strides = [1, 1]} : vector<8x768xf32> to vector<8x256xf32>
    %57 = vector.extract_strided_slice %51 {offsets = [0, 512], sizes = [8, 256], strides = [1, 1]} : vector<8x768xf32> to vector<8x256xf32>
    %58 = arith.addf %52, %55 : vector<8x256xf32>
    %59 = arith.negf %58 : vector<8x256xf32>
    %60 = math.exp %59 : vector<8x256xf32>
    %cst_20 = arith.constant 1.000000e+00 : f32
    %61 = vector.broadcast %cst_20 : f32 to vector<8x256xf32>
    %62 = arith.addf %61, %60 : vector<8x256xf32>
    %63 = arith.divf %61, %62 : vector<8x256xf32>
    %64 = arith.addf %53, %56 : vector<8x256xf32>
    %65 = arith.negf %64 : vector<8x256xf32>
    %66 = math.exp %65 : vector<8x256xf32>
    %cst_21 = arith.constant 1.000000e+00 : f32
    %67 = vector.broadcast %cst_21 : f32 to vector<8x256xf32>
    %68 = arith.addf %67, %66 : vector<8x256xf32>
    %69 = arith.divf %67, %68 : vector<8x256xf32>
    %70 = arith.mulf %63, %57 : vector<8x256xf32>
    %71 = arith.addf %54, %70 : vector<8x256xf32>
    %72 = math.tanh %71 : vector<8x256xf32>
    %cst_22 = arith.constant 1.000000e+00 : f32
    %73 = vector.broadcast %cst_22 : f32 to vector<8x256xf32>
    %74 = arith.subf %73, %69 : vector<8x256xf32>
    %75 = arith.mulf %74, %72 : vector<8x256xf32>
    %76 = arith.mulf %69, %44 : vector<8x256xf32>
    %77 = arith.addf %75, %76 : vector<8x256xf32>
    %c2_i32 = arith.constant 2 : i32
    %c8_i32_23 = arith.constant 8 : i32
    %78 = arith.muli %c2_i32, %c8_i32_23 : i32
    %79 = tpu.assume_multiple %78, 8 : i32
    %80 = arith.index_cast %79 : i32 to index
    %c0_24 = arith.constant 0 : index
    %81 = vector.load %arg6[%80, %c0_24] : memref<64x768xf32, #tpu.memory_space<vmem>>, vector<8x768xf32>
    %82 = arith.truncf %77 : vector<8x256xf32> to vector<8x256xbf16>
    %cst_25 = arith.constant dense<0.000000e+00> : vector<8x768xf32>
    %83 = tpu.matmul %82, %7, %cst_25 {dimension_numbers = #tpu.dot_dimension_numbers<[1], [0], [0], [1], [0, 0, 1, 1], [], []>} : vector<8x256xbf16>, vector<256x768xbf16>, vector<8x768xf32> -> vector<8x768xf32>
    %84 = arith.addf %83, %10 : vector<8x768xf32>
    %85 = vector.extract_strided_slice %81 {offsets = [0, 0], sizes = [8, 256], strides = [1, 1]} : vector<8x768xf32> to vector<8x256xf32>
    %86 = vector.extract_strided_slice %81 {offsets = [0, 256], sizes = [8, 256], strides = [1, 1]} : vector<8x768xf32> to vector<8x256xf32>
    %87 = vector.extract_strided_slice %81 {offsets = [0, 512], sizes = [8, 256], strides = [1, 1]} : vector<8x768xf32> to vector<8x256xf32>
    %88 = vector.extract_strided_slice %84 {offsets = [0, 0], sizes = [8, 256], strides = [1, 1]} : vector<8x768xf32> to vector<8x256xf32>
    %89 = vector.extract_strided_slice %84 {offsets = [0, 256], sizes = [8, 256], strides = [1, 1]} : vector<8x768xf32> to vector<8x256xf32>
    %90 = vector.extract_strided_slice %84 {offsets = [0, 512], sizes = [8, 256], strides = [1, 1]} : vector<8x768xf32> to vector<8x256xf32>
    %91 = arith.addf %85, %88 : vector<8x256xf32>
    %92 = arith.negf %91 : vector<8x256xf32>
    %93 = math.exp %92 : vector<8x256xf32>
    %cst_26 = arith.constant 1.000000e+00 : f32
    %94 = vector.broadcast %cst_26 : f32 to vector<8x256xf32>
    %95 = arith.addf %94, %93 : vector<8x256xf32>
    %96 = arith.divf %94, %95 : vector<8x256xf32>
    %97 = arith.addf %86, %89 : vector<8x256xf32>
    %98 = arith.negf %97 : vector<8x256xf32>
    %99 = math.exp %98 : vector<8x256xf32>
    %cst_27 = arith.constant 1.000000e+00 : f32
    %100 = vector.broadcast %cst_27 : f32 to vector<8x256xf32>
    %101 = arith.addf %100, %99 : vector<8x256xf32>
    %102 = arith.divf %100, %101 : vector<8x256xf32>
    %103 = arith.mulf %96, %90 : vector<8x256xf32>
    %104 = arith.addf %87, %103 : vector<8x256xf32>
    %105 = math.tanh %104 : vector<8x256xf32>
    %cst_28 = arith.constant 1.000000e+00 : f32
    %106 = vector.broadcast %cst_28 : f32 to vector<8x256xf32>
    %107 = arith.subf %106, %102 : vector<8x256xf32>
    %108 = arith.mulf %107, %105 : vector<8x256xf32>
    %109 = arith.mulf %102, %77 : vector<8x256xf32>
    %110 = arith.addf %108, %109 : vector<8x256xf32>
    %c3_i32 = arith.constant 3 : i32
    %c8_i32_29 = arith.constant 8 : i32
    %111 = arith.muli %c3_i32, %c8_i32_29 : i32
    %112 = tpu.assume_multiple %111, 8 : i32
    %113 = arith.index_cast %112 : i32 to index
    %c0_30 = arith.constant 0 : index
    %114 = vector.load %arg6[%113, %c0_30] : memref<64x768xf32, #tpu.memory_space<vmem>>, vector<8x768xf32>
    %115 = arith.truncf %110 : vector<8x256xf32> to vector<8x256xbf16>
    %cst_31 = arith.constant dense<0.000000e+00> : vector<8x768xf32>
    %116 = tpu.matmul %115, %7, %cst_31 {dimension_numbers = #tpu.dot_dimension_numbers<[1], [0], [0], [1], [0, 0, 1, 1], [], []>} : vector<8x256xbf16>, vector<256x768xbf16>, vector<8x768xf32> -> vector<8x768xf32>
    %117 = arith.addf %116, %10 : vector<8x768xf32>
    %118 = vector.extract_strided_slice %114 {offsets = [0, 0], sizes = [8, 256], strides = [1, 1]} : vector<8x768xf32> to vector<8x256xf32>
    %119 = vector.extract_strided_slice %114 {offsets = [0, 256], sizes = [8, 256], strides = [1, 1]} : vector<8x768xf32> to vector<8x256xf32>
    %120 = vector.extract_strided_slice %114 {offsets = [0, 512], sizes = [8, 256], strides = [1, 1]} : vector<8x768xf32> to vector<8x256xf32>
    %121 = vector.extract_strided_slice %117 {offsets = [0, 0], sizes = [8, 256], strides = [1, 1]} : vector<8x768xf32> to vector<8x256xf32>
    %122 = vector.extract_strided_slice %117 {offsets = [0, 256], sizes = [8, 256], strides = [1, 1]} : vector<8x768xf32> to vector<8x256xf32>
    %123 = vector.extract_strided_slice %117 {offsets = [0, 512], sizes = [8, 256], strides = [1, 1]} : vector<8x768xf32> to vector<8x256xf32>
    %124 = arith.addf %118, %121 : vector<8x256xf32>
    %125 = arith.negf %124 : vector<8x256xf32>
    %126 = math.exp %125 : vector<8x256xf32>
    %cst_32 = arith.constant 1.000000e+00 : f32
    %127 = vector.broadcast %cst_32 : f32 to vector<8x256xf32>
    %128 = arith.addf %127, %126 : vector<8x256xf32>
    %129 = arith.divf %127, %128 : vector<8x256xf32>
    %130 = arith.addf %119, %122 : vector<8x256xf32>
    %131 = arith.negf %130 : vector<8x256xf32>
    %132 = math.exp %131 : vector<8x256xf32>
    %cst_33 = arith.constant 1.000000e+00 : f32
    %133 = vector.broadcast %cst_33 : f32 to vector<8x256xf32>
    %134 = arith.addf %133, %132 : vector<8x256xf32>
    %135 = arith.divf %133, %134 : vector<8x256xf32>
    %136 = arith.mulf %129, %123 : vector<8x256xf32>
    %137 = arith.addf %120, %136 : vector<8x256xf32>
    %138 = math.tanh %137 : vector<8x256xf32>
    %cst_34 = arith.constant 1.000000e+00 : f32
    %139 = vector.broadcast %cst_34 : f32 to vector<8x256xf32>
    %140 = arith.subf %139, %135 : vector<8x256xf32>
    %141 = arith.mulf %140, %138 : vector<8x256xf32>
    %142 = arith.mulf %135, %110 : vector<8x256xf32>
    %143 = arith.addf %141, %142 : vector<8x256xf32>
    %c4_i32 = arith.constant 4 : i32
    %c8_i32_35 = arith.constant 8 : i32
    %144 = arith.muli %c4_i32, %c8_i32_35 : i32
    %145 = tpu.assume_multiple %144, 8 : i32
    %146 = arith.index_cast %145 : i32 to index
    %c0_36 = arith.constant 0 : index
    %147 = vector.load %arg6[%146, %c0_36] : memref<64x768xf32, #tpu.memory_space<vmem>>, vector<8x768xf32>
    %148 = arith.truncf %143 : vector<8x256xf32> to vector<8x256xbf16>
    %cst_37 = arith.constant dense<0.000000e+00> : vector<8x768xf32>
    %149 = tpu.matmul %148, %7, %cst_37 {dimension_numbers = #tpu.dot_dimension_numbers<[1], [0], [0], [1], [0, 0, 1, 1], [], []>} : vector<8x256xbf16>, vector<256x768xbf16>, vector<8x768xf32> -> vector<8x768xf32>
    %150 = arith.addf %149, %10 : vector<8x768xf32>
    %151 = vector.extract_strided_slice %147 {offsets = [0, 0], sizes = [8, 256], strides = [1, 1]} : vector<8x768xf32> to vector<8x256xf32>
    %152 = vector.extract_strided_slice %147 {offsets = [0, 256], sizes = [8, 256], strides = [1, 1]} : vector<8x768xf32> to vector<8x256xf32>
    %153 = vector.extract_strided_slice %147 {offsets = [0, 512], sizes = [8, 256], strides = [1, 1]} : vector<8x768xf32> to vector<8x256xf32>
    %154 = vector.extract_strided_slice %150 {offsets = [0, 0], sizes = [8, 256], strides = [1, 1]} : vector<8x768xf32> to vector<8x256xf32>
    %155 = vector.extract_strided_slice %150 {offsets = [0, 256], sizes = [8, 256], strides = [1, 1]} : vector<8x768xf32> to vector<8x256xf32>
    %156 = vector.extract_strided_slice %150 {offsets = [0, 512], sizes = [8, 256], strides = [1, 1]} : vector<8x768xf32> to vector<8x256xf32>
    %157 = arith.addf %151, %154 : vector<8x256xf32>
    %158 = arith.negf %157 : vector<8x256xf32>
    %159 = math.exp %158 : vector<8x256xf32>
    %cst_38 = arith.constant 1.000000e+00 : f32
    %160 = vector.broadcast %cst_38 : f32 to vector<8x256xf32>
    %161 = arith.addf %160, %159 : vector<8x256xf32>
    %162 = arith.divf %160, %161 : vector<8x256xf32>
    %163 = arith.addf %152, %155 : vector<8x256xf32>
    %164 = arith.negf %163 : vector<8x256xf32>
    %165 = math.exp %164 : vector<8x256xf32>
    %cst_39 = arith.constant 1.000000e+00 : f32
    %166 = vector.broadcast %cst_39 : f32 to vector<8x256xf32>
    %167 = arith.addf %166, %165 : vector<8x256xf32>
    %168 = arith.divf %166, %167 : vector<8x256xf32>
    %169 = arith.mulf %162, %156 : vector<8x256xf32>
    %170 = arith.addf %153, %169 : vector<8x256xf32>
    %171 = math.tanh %170 : vector<8x256xf32>
    %cst_40 = arith.constant 1.000000e+00 : f32
    %172 = vector.broadcast %cst_40 : f32 to vector<8x256xf32>
    %173 = arith.subf %172, %168 : vector<8x256xf32>
    %174 = arith.mulf %173, %171 : vector<8x256xf32>
    %175 = arith.mulf %168, %143 : vector<8x256xf32>
    %176 = arith.addf %174, %175 : vector<8x256xf32>
    %c5_i32 = arith.constant 5 : i32
    %c8_i32_41 = arith.constant 8 : i32
    %177 = arith.muli %c5_i32, %c8_i32_41 : i32
    %178 = tpu.assume_multiple %177, 8 : i32
    %179 = arith.index_cast %178 : i32 to index
    %c0_42 = arith.constant 0 : index
    %180 = vector.load %arg6[%179, %c0_42] : memref<64x768xf32, #tpu.memory_space<vmem>>, vector<8x768xf32>
    %181 = arith.truncf %176 : vector<8x256xf32> to vector<8x256xbf16>
    %cst_43 = arith.constant dense<0.000000e+00> : vector<8x768xf32>
    %182 = tpu.matmul %181, %7, %cst_43 {dimension_numbers = #tpu.dot_dimension_numbers<[1], [0], [0], [1], [0, 0, 1, 1], [], []>} : vector<8x256xbf16>, vector<256x768xbf16>, vector<8x768xf32> -> vector<8x768xf32>
    %183 = arith.addf %182, %10 : vector<8x768xf32>
    %184 = vector.extract_strided_slice %180 {offsets = [0, 0], sizes = [8, 256], strides = [1, 1]} : vector<8x768xf32> to vector<8x256xf32>
    %185 = vector.extract_strided_slice %180 {offsets = [0, 256], sizes = [8, 256], strides = [1, 1]} : vector<8x768xf32> to vector<8x256xf32>
    %186 = vector.extract_strided_slice %180 {offsets = [0, 512], sizes = [8, 256], strides = [1, 1]} : vector<8x768xf32> to vector<8x256xf32>
    %187 = vector.extract_strided_slice %183 {offsets = [0, 0], sizes = [8, 256], strides = [1, 1]} : vector<8x768xf32> to vector<8x256xf32>
    %188 = vector.extract_strided_slice %183 {offsets = [0, 256], sizes = [8, 256], strides = [1, 1]} : vector<8x768xf32> to vector<8x256xf32>
    %189 = vector.extract_strided_slice %183 {offsets = [0, 512], sizes = [8, 256], strides = [1, 1]} : vector<8x768xf32> to vector<8x256xf32>
    %190 = arith.addf %184, %187 : vector<8x256xf32>
    %191 = arith.negf %190 : vector<8x256xf32>
    %192 = math.exp %191 : vector<8x256xf32>
    %cst_44 = arith.constant 1.000000e+00 : f32
    %193 = vector.broadcast %cst_44 : f32 to vector<8x256xf32>
    %194 = arith.addf %193, %192 : vector<8x256xf32>
    %195 = arith.divf %193, %194 : vector<8x256xf32>
    %196 = arith.addf %185, %188 : vector<8x256xf32>
    %197 = arith.negf %196 : vector<8x256xf32>
    %198 = math.exp %197 : vector<8x256xf32>
    %cst_45 = arith.constant 1.000000e+00 : f32
    %199 = vector.broadcast %cst_45 : f32 to vector<8x256xf32>
    %200 = arith.addf %199, %198 : vector<8x256xf32>
    %201 = arith.divf %199, %200 : vector<8x256xf32>
    %202 = arith.mulf %195, %189 : vector<8x256xf32>
    %203 = arith.addf %186, %202 : vector<8x256xf32>
    %204 = math.tanh %203 : vector<8x256xf32>
    %cst_46 = arith.constant 1.000000e+00 : f32
    %205 = vector.broadcast %cst_46 : f32 to vector<8x256xf32>
    %206 = arith.subf %205, %201 : vector<8x256xf32>
    %207 = arith.mulf %206, %204 : vector<8x256xf32>
    %208 = arith.mulf %201, %176 : vector<8x256xf32>
    %209 = arith.addf %207, %208 : vector<8x256xf32>
    %c6_i32 = arith.constant 6 : i32
    %c8_i32_47 = arith.constant 8 : i32
    %210 = arith.muli %c6_i32, %c8_i32_47 : i32
    %211 = tpu.assume_multiple %210, 8 : i32
    %212 = arith.index_cast %211 : i32 to index
    %c0_48 = arith.constant 0 : index
    %213 = vector.load %arg6[%212, %c0_48] : memref<64x768xf32, #tpu.memory_space<vmem>>, vector<8x768xf32>
    %214 = arith.truncf %209 : vector<8x256xf32> to vector<8x256xbf16>
    %cst_49 = arith.constant dense<0.000000e+00> : vector<8x768xf32>
    %215 = tpu.matmul %214, %7, %cst_49 {dimension_numbers = #tpu.dot_dimension_numbers<[1], [0], [0], [1], [0, 0, 1, 1], [], []>} : vector<8x256xbf16>, vector<256x768xbf16>, vector<8x768xf32> -> vector<8x768xf32>
    %216 = arith.addf %215, %10 : vector<8x768xf32>
    %217 = vector.extract_strided_slice %213 {offsets = [0, 0], sizes = [8, 256], strides = [1, 1]} : vector<8x768xf32> to vector<8x256xf32>
    %218 = vector.extract_strided_slice %213 {offsets = [0, 256], sizes = [8, 256], strides = [1, 1]} : vector<8x768xf32> to vector<8x256xf32>
    %219 = vector.extract_strided_slice %213 {offsets = [0, 512], sizes = [8, 256], strides = [1, 1]} : vector<8x768xf32> to vector<8x256xf32>
    %220 = vector.extract_strided_slice %216 {offsets = [0, 0], sizes = [8, 256], strides = [1, 1]} : vector<8x768xf32> to vector<8x256xf32>
    %221 = vector.extract_strided_slice %216 {offsets = [0, 256], sizes = [8, 256], strides = [1, 1]} : vector<8x768xf32> to vector<8x256xf32>
    %222 = vector.extract_strided_slice %216 {offsets = [0, 512], sizes = [8, 256], strides = [1, 1]} : vector<8x768xf32> to vector<8x256xf32>
    %223 = arith.addf %217, %220 : vector<8x256xf32>
    %224 = arith.negf %223 : vector<8x256xf32>
    %225 = math.exp %224 : vector<8x256xf32>
    %cst_50 = arith.constant 1.000000e+00 : f32
    %226 = vector.broadcast %cst_50 : f32 to vector<8x256xf32>
    %227 = arith.addf %226, %225 : vector<8x256xf32>
    %228 = arith.divf %226, %227 : vector<8x256xf32>
    %229 = arith.addf %218, %221 : vector<8x256xf32>
    %230 = arith.negf %229 : vector<8x256xf32>
    %231 = math.exp %230 : vector<8x256xf32>
    %cst_51 = arith.constant 1.000000e+00 : f32
    %232 = vector.broadcast %cst_51 : f32 to vector<8x256xf32>
    %233 = arith.addf %232, %231 : vector<8x256xf32>
    %234 = arith.divf %232, %233 : vector<8x256xf32>
    %235 = arith.mulf %228, %222 : vector<8x256xf32>
    %236 = arith.addf %219, %235 : vector<8x256xf32>
    %237 = math.tanh %236 : vector<8x256xf32>
    %cst_52 = arith.constant 1.000000e+00 : f32
    %238 = vector.broadcast %cst_52 : f32 to vector<8x256xf32>
    %239 = arith.subf %238, %234 : vector<8x256xf32>
    %240 = arith.mulf %239, %237 : vector<8x256xf32>
    %241 = arith.mulf %234, %209 : vector<8x256xf32>
    %242 = arith.addf %240, %241 : vector<8x256xf32>
    %c7_i32 = arith.constant 7 : i32
    %c8_i32_53 = arith.constant 8 : i32
    %243 = arith.muli %c7_i32, %c8_i32_53 : i32
    %244 = tpu.assume_multiple %243, 8 : i32
    %245 = arith.index_cast %244 : i32 to index
    %c0_54 = arith.constant 0 : index
    %246 = vector.load %arg6[%245, %c0_54] : memref<64x768xf32, #tpu.memory_space<vmem>>, vector<8x768xf32>
    %247 = arith.truncf %242 : vector<8x256xf32> to vector<8x256xbf16>
    %cst_55 = arith.constant dense<0.000000e+00> : vector<8x768xf32>
    %248 = tpu.matmul %247, %7, %cst_55 {dimension_numbers = #tpu.dot_dimension_numbers<[1], [0], [0], [1], [0, 0, 1, 1], [], []>} : vector<8x256xbf16>, vector<256x768xbf16>, vector<8x768xf32> -> vector<8x768xf32>
    %249 = arith.addf %248, %10 : vector<8x768xf32>
    %250 = vector.extract_strided_slice %246 {offsets = [0, 0], sizes = [8, 256], strides = [1, 1]} : vector<8x768xf32> to vector<8x256xf32>
    %251 = vector.extract_strided_slice %246 {offsets = [0, 256], sizes = [8, 256], strides = [1, 1]} : vector<8x768xf32> to vector<8x256xf32>
    %252 = vector.extract_strided_slice %246 {offsets = [0, 512], sizes = [8, 256], strides = [1, 1]} : vector<8x768xf32> to vector<8x256xf32>
    %253 = vector.extract_strided_slice %249 {offsets = [0, 0], sizes = [8, 256], strides = [1, 1]} : vector<8x768xf32> to vector<8x256xf32>
    %254 = vector.extract_strided_slice %249 {offsets = [0, 256], sizes = [8, 256], strides = [1, 1]} : vector<8x768xf32> to vector<8x256xf32>
    %255 = vector.extract_strided_slice %249 {offsets = [0, 512], sizes = [8, 256], strides = [1, 1]} : vector<8x768xf32> to vector<8x256xf32>
    %256 = arith.addf %250, %253 : vector<8x256xf32>
    %257 = arith.negf %256 : vector<8x256xf32>
    %258 = math.exp %257 : vector<8x256xf32>
    %cst_56 = arith.constant 1.000000e+00 : f32
    %259 = vector.broadcast %cst_56 : f32 to vector<8x256xf32>
    %260 = arith.addf %259, %258 : vector<8x256xf32>
    %261 = arith.divf %259, %260 : vector<8x256xf32>
    %262 = arith.addf %251, %254 : vector<8x256xf32>
    %263 = arith.negf %262 : vector<8x256xf32>
    %264 = math.exp %263 : vector<8x256xf32>
    %cst_57 = arith.constant 1.000000e+00 : f32
    %265 = vector.broadcast %cst_57 : f32 to vector<8x256xf32>
    %266 = arith.addf %265, %264 : vector<8x256xf32>
    %267 = arith.divf %265, %266 : vector<8x256xf32>
    %268 = arith.mulf %261, %255 : vector<8x256xf32>
    %269 = arith.addf %252, %268 : vector<8x256xf32>
    %270 = math.tanh %269 : vector<8x256xf32>
    %cst_58 = arith.constant 1.000000e+00 : f32
    %271 = vector.broadcast %cst_58 : f32 to vector<8x256xf32>
    %272 = arith.subf %271, %267 : vector<8x256xf32>
    %273 = arith.mulf %272, %270 : vector<8x256xf32>
    %274 = arith.mulf %267, %242 : vector<8x256xf32>
    %275 = arith.addf %273, %274 : vector<8x256xf32>
    %c8_i32_59 = arith.constant 8 : i32
    %c0_60 = arith.constant 0 : index
    %c0_61 = arith.constant 0 : index
    %276 = vector.load %arg5[%c0_60, %c0_61] : memref<8x256xf32, #tpu.memory_space<vmem>>, vector<8x256xf32>
    tpu.vector_store %arg5[%c0_60, %c0_61], %275 {strides = array<i32>} : memref<8x256xf32, #tpu.memory_space<vmem>>, vector<8x256xf32>,
    return
  }
}

</mosaic_0001>

<llo_original>
// kernel: tpu_custom_call.1
$region0: #{tpu_custom_call.1}
  #allocation0 [shape = 'u32[]', space=smem, size = 0x4, offset = 0x4, fixed_abs, tag = 'smem constant byte address 0x4 - core index']
  #allocation1 [shape = 'u32[144,128]{1,0:T(1,128)}', space=vmem, size = 0x12000, scoped, tag = 'internal scratch']
  #allocation2 [shape = 'f32[64,768]{1,0:T(8,128)}', space=vmem, size = 0x30000, scoped, tag = 'scratch operand']
  %s0 = inlined_call_operand.hbm [shape: bf16[64,128], index: 0, kind: input, shape index: {}]
  %s1 = inlined_call_operand.hbm [shape: bf16[128,768], index: 1, kind: input, shape index: {}]
  %s2 = inlined_call_operand.hbm [shape: bf16[256,768], index: 2, kind: input, shape index: {}]
  %s3 = inlined_call_operand.vmem [shape: f32[1,768], index: 3, kind: input, shape index: {}]
  %s4 = inlined_call_operand.vmem [shape: f32[1,768], index: 4, kind: input, shape index: {}]
  %s5 = inlined_call_operand.hbm [shape: f32[8,256], index: 5, kind: output, shape index: {}]
  %s6 = sld [smem:[#allocation0]]
  $region42: #{tpu_custom_call.1} parent=0
    _
  %s8 = ssub.s32 1, %s6
  %s9 = scalar_select 0, %s8, %s6
  $region1: #{tpu_custom_call.1} parent=0
    #allocation3 [shape = 'u8[16384]{0}', space=vmem, size = 0x4000, scoped, tag = 'input window, operand 0, single buffered']
    #allocation4 [shape = 's32[1]{0}', space=sflag, size = 0x4, scoped, tag = 'scoped memory for tpu_custom_call.1']
    #allocation5 [shape = 's32[1]{0}', space=sflag, size = 0x4, scoped, tag = 'scoped memory for tpu_custom_call.1']
    #allocation6 [shape = 'u8[196608]{0}', space=vmem, size = 0x30000, scoped, tag = 'input window, operand 1, single buffered']
    #allocation7 [shape = 's32[1]{0}', space=sflag, size = 0x4, scoped, tag = 'scoped memory for tpu_custom_call.1']
    #allocation8 [shape = 'u8[393216]{0}', space=vmem, size = 0x60000, scoped, tag = 'input window, operand 2, single buffered']
    #allocation9 [shape = 'u8[8192]{0}', space=vmem, size = 0x2000, scoped, tag = 'output window, operand 0, single buffered']
    %10 = vsyncpa [#allocation4], 0
    %11 = vsyncpa [#allocation7], 0
    %12 = vsyncpa [#allocation5], 0
    // Predicated region
    $region2: #{tpu_custom_call.1} parent=1 // pred_check
      _
    $region3: #{tpu_custom_call.1} parent=1 // pred_check_branch
      %14 = sbr.rel (0) target = $region5
    $region4: #{tpu_custom_call.1} parent=1 // pred_region
      %s16 = ssub.s32 512, 512
      %17 = vsyncadd [#allocation4], %s16
      %s18 = sshll.u32 [#allocation3], 4
      %s19 = int_to_ptr.vmem [resolvable:$true] %s18
      %24 = dma.hbm_to_vmem [thread:$0]  %s0, 512, %s19, [#allocation4], 64, 64, 4
    $region5: #{tpu_custom_call.1} parent=1 // pred_fallthru
      _
    // Predicated region
    $region6: #{tpu_custom_call.1} parent=1 // pred_check
      _
    $region7: #{tpu_custom_call.1} parent=1 // pred_check_branch
      %26 = sbr.rel (0) target = $region9
    $region8: #{tpu_custom_call.1} parent=1 // pred_region
      %s28 = ssub.s32 6144, 6144
      %29 = vsyncadd [#allocation7], %s28
      %s30 = sshll.u32 [#allocation6], 4
      %s31 = int_to_ptr.vmem [resolvable:$true] %s30
      %36 = dma.hbm_to_vmem [thread:$0]  %s1, 6144, %s31, [#allocation7], 384, 384, 24
    $region9: #{tpu_custom_call.1} parent=1 // pred_fallthru
      _
    // Predicated region
    $region10: #{tpu_custom_call.1} parent=1 // pred_check
      _
    $region11: #{tpu_custom_call.1} parent=1 // pred_check_branch
      %38 = sbr.rel (0) target = $region13
    $region12: #{tpu_custom_call.1} parent=1 // pred_region
      %s40 = ssub.s32 12288, 12288
      %41 = vsyncadd [#allocation7], %s40
      %s42 = sshll.u32 [#allocation8], 4
      %s43 = int_to_ptr.vmem [resolvable:$true] %s42
      %48 = dma.hbm_to_vmem [thread:$0]  %s2, 12288, %s43, [#allocation7], 384, 384, 24
    $region13: #{tpu_custom_call.1} parent=1 // pred_fallthru
      _
    // Predicated region
    $region14: #{tpu_custom_call.1} parent=1 // pred_check
      _
    $region15: #{tpu_custom_call.1} parent=1 // pred_check_branch
      %50 = sbr.rel (0) target = $region17
    $region16: #{tpu_custom_call.1} parent=1 // pred_region
      _
    $region17: #{tpu_custom_call.1} parent=1 // pred_fallthru
      _
    // Predicated region
    $region18: #{tpu_custom_call.1} parent=1 // pred_check
      _
    $region19: #{tpu_custom_call.1} parent=1 // pred_check_branch
      %52 = sbr.rel (0) target = $region21
    $region20: #{tpu_custom_call.1} parent=1 // pred_region
      _
    $region21: #{tpu_custom_call.1} parent=1 // pred_fallthru
      _
    // Predicated region
    $region22: #{tpu_custom_call.1} parent=1 // pred_check
      _
    $region23: #{tpu_custom_call.1} parent=1 // pred_check_branch
      %54 = sbr.rel (0) target = $region25
    $region24: #{tpu_custom_call.1} parent=1 // pred_region
      %55 = dma.done [#allocation4], 512
    $region25: #{tpu_custom_call.1} parent=1 // pred_fallthru
      _
    // Predicated region
    $region26: #{tpu_custom_call.1} parent=1 // pred_check
      _
    $region27: #{tpu_custom_call.1} parent=1 // pred_check_branch
      %57 = sbr.rel (0) target = $region29
    $region28: #{tpu_custom_call.1} parent=1 // pred_region
      %58 = dma.done [#allocation7], 6144
    $region29: #{tpu_custom_call.1} parent=1 // pred_fallthru
      _
    // Predicated region
    $region30: #{tpu_custom_call.1} parent=1 // pred_check
      _
    $region31: #{tpu_custom_call.1} parent=1 // pred_check_branch
      %60 = sbr.rel (0) target = $region33
    $region32: #{tpu_custom_call.1} parent=1 // pred_region
      %61 = dma.done [#allocation7], 12288
    $region33: #{tpu_custom_call.1} parent=1 // pred_fallthru
      _
    %v63 = vld [vmem:[#allocation3] sm:$0xf]
    %v64 = vld [vmem:[#allocation3 + $0x4] sm:$0xf]
    %v65 = vld [vmem:[#allocation3 + $0x8] sm:$0xf]
    %v66 = vld [vmem:[#allocation3 + $0xc] sm:$0xf]
    %v67 = vld [vmem:[#allocation3 + $0x10] sm:$0xf]
    %v68 = vld [vmem:[#allocation3 + $0x14] sm:$0xf]
    %v69 = vld [vmem:[#allocation3 + $0x18] sm:$0xf]
    %v70 = vld [vmem:[#allocation3 + $0x1c] sm:$0xf]
    %v71 = vld [vmem:[#allocation6] sm:$0xff]
    %v72 = vld [vmem:[#allocation6 + $0x8] sm:$0xff]
    %v73 = vld [vmem:[#allocation6 + $0x10] sm:$0xff]
    %v74 = vld [vmem:[#allocation6 + $0x18] sm:$0xff]
    %v75 = vld [vmem:[#allocation6 + $0x20] sm:$0xff]
    %v76 = vld [vmem:[#allocation6 + $0x28] sm:$0xff]
    %v77 = vld [vmem:[#allocation6 + $0x30] sm:$0xff]
    %v78 = vld [vmem:[#allocation6 + $0x38] sm:$0xff]
    %v79 = vld [vmem:[#allocation6 + $0x40] sm:$0xff]
    %v80 = vld [vmem:[#allocation6 + $0x48] sm:$0xff]
    %v81 = vld [vmem:[#allocation6 + $0x50] sm:$0xff]
    %v82 = vld [vmem:[#allocation6 + $0x58] sm:$0xff]
    %v83 = vld [vmem:[#allocation6 + $0x60] sm:$0xff]
    %v84 = vld [vmem:[#allocation6 + $0x68] sm:$0xff]
    %v85 = vld [vmem:[#allocation6 + $0x70] sm:$0xff]
    %v86 = vld [vmem:[#allocation6 + $0x78] sm:$0xff]
    %v87 = vld [vmem:[#allocation6 + $0x80] sm:$0xff]
    %v88 = vld [vmem:[#allocation6 + $0x88] sm:$0xff]
    %v89 = vld [vmem:[#allocation6 + $0x90] sm:$0xff]
    %v90 = vld [vmem:[#allocation6 + $0x98] sm:$0xff]
    %v91 = vld [vmem:[#allocation6 + $0xa0] sm:$0xff]
    %v92 = vld [vmem:[#allocation6 + $0xa8] sm:$0xff]
    %v93 = vld [vmem:[#allocation6 + $0xb0] sm:$0xff]
    %v94 = vld [vmem:[#allocation6 + $0xb8] sm:$0xff]
    %v95 = vld [vmem:[#allocation6 + $0xc0] sm:$0xff]
    %v96 = vld [vmem:[#allocation6 + $0xc8] sm:$0xff]
    %v97 = vld [vmem:[#allocation6 + $0xd0] sm:$0xff]
    %v98 = vld [vmem:[#allocation6 + $0xd8] sm:$0xff]
    %v99 = vld [vmem:[#allocation6 + $0xe0] sm:$0xff]
    %v100 = vld [vmem:[#allocation6 + $0xe8] sm:$0xff]
    %v101 = vld [vmem:[#allocation6 + $0xf0] sm:$0xff]
    %v102 = vld [vmem:[#allocation6 + $0xf8] sm:$0xff]
    %v103 = vld [vmem:[#allocation6 + $0x100] sm:$0xff]
    %v104 = vld [vmem:[#allocation6 + $0x108] sm:$0xff]
    %v105 = vld [vmem:[#allocation6 + $0x110] sm:$0xff]
    %v106 = vld [vmem:[#allocation6 + $0x118] sm:$0xff]
    %v107 = vld [vmem:[#allocation6 + $0x120] sm:$0xff]
    %v108 = vld [vmem:[#allocation6 + $0x128] sm:$0xff]
    %v109 = vld [vmem:[#allocation6 + $0x130] sm:$0xff]
    %v110 = vld [vmem:[#allocation6 + $0x138] sm:$0xff]
    %v111 = vld [vmem:[#allocation6 + $0x140] sm:$0xff]
    %v112 = vld [vmem:[#allocation6 + $0x148] sm:$0xff]
    %v113 = vld [vmem:[#allocation6 + $0x150] sm:$0xff]
    %v114 = vld [vmem:[#allocation6 + $0x158] sm:$0xff]
    %v115 = vld [vmem:[#allocation6 + $0x160] sm:$0xff]
    %v116 = vld [vmem:[#allocation6 + $0x168] sm:$0xff]
    %v117 = vld [vmem:[#allocation6 + $0x170] sm:$0xff]
    %v118 = vld [vmem:[#allocation6 + $0x178] sm:$0xff]
    %v119 = vld [vmem:[%s3] sm:$0x3f]
    %v121 = vlaneseq
    %v122 = vshrl.u32 %v121, 7
    %v123 = vsub.s32 0, %v122
    %v124 = vrot.slane %v119, %v123
    %v125 = vlaneseq
    %v126 = vshrl.u32 %v125, 7
    %v127 = vsub.s32 1, %v126
    %v128 = vrot.slane %v119, %v127
    %v129 = vlaneseq
    %v130 = vshrl.u32 %v129, 7
    %v131 = vsub.s32 2, %v130
    %v132 = vrot.slane %v119, %v131
    %v133 = vlaneseq
    %v134 = vshrl.u32 %v133, 7
    %v135 = vsub.s32 3, %v134
    %v136 = vrot.slane %v119, %v135
    %v137 = vlaneseq
    %v138 = vshrl.u32 %v137, 7
    %v139 = vsub.s32 4, %v138
    %v140 = vrot.slane %v119, %v139
    %v141 = vlaneseq
    %v142 = vshrl.u32 %v141, 7
    %v143 = vsub.s32 5, %v142
    %v144 = vrot.slane %v119, %v143
    %v159 = vunpack.c.l.b16 %v63
    %v160 = vunpack.c.l.b16 %v64
    %v161 = vunpack.c.l.b16 %v65
    %v162 = vunpack.c.l.b16 %v66
    %v163 = vunpack.c.l.b16 %v67
    %v164 = vunpack.c.l.b16 %v68
    %v165 = vunpack.c.l.b16 %v69
    %v166 = vunpack.c.l.b16 %v70
    %v167 = vpack.c.b16 %v160, %v159
    %v168 = vpack.c.b16 %v162, %v161
    %v169 = vpack.c.b16 %v164, %v163
    %v170 = vpack.c.b16 %v166, %v165
    %v223 = vunpack.c.l.b16 %v71
    %v224 = vunpack.c.h.b16 %v71
    %v225 = vunpack.c.l.b16 %v72
    %v226 = vunpack.c.h.b16 %v72
    %v227 = vunpack.c.l.b16 %v73
    %v228 = vunpack.c.h.b16 %v73
    %v229 = vunpack.c.l.b16 %v74
    %v230 = vunpack.c.h.b16 %v74
    %v231 = vunpack.c.l.b16 %v75
    %v232 = vunpack.c.h.b16 %v75
    %v233 = vunpack.c.l.b16 %v76
    %v234 = vunpack.c.h.b16 %v76
    %v235 = vunpack.c.l.b16 %v77
    %v236 = vunpack.c.h.b16 %v77
    %v237 = vunpack.c.l.b16 %v78
    %v238 = vunpack.c.h.b16 %v78
    %v239 = vunpack.c.l.b16 %v79
    %v240 = vunpack.c.h.b16 %v79
    %v241 = vunpack.c.l.b16 %v80
    %v242 = vunpack.c.h.b16 %v80
    %v243 = vunpack.c.l.b16 %v81
    %v244 = vunpack.c.h.b16 %v81
    %v245 = vunpack.c.l.b16 %v82
    %v246 = vunpack.c.h.b16 %v82
    %v247 = vunpack.c.l.b16 %v83
    %v248 = vunpack.c.h.b16 %v83
    %v249 = vunpack.c.l.b16 %v84
    %v250 = vunpack.c.h.b16 %v84
    %v251 = vunpack.c.l.b16 %v85
    %v252 = vunpack.c.h.b16 %v85
    %v253 = vunpack.c.l.b16 %v86
    %v254 = vunpack.c.h.b16 %v86
    %v255 = vunpack.c.l.b16 %v87
    %v256 = vunpack.c.h.b16 %v87
    %v257 = vunpack.c.l.b16 %v88
    %v258 = vunpack.c.h.b16 %v88
    %v259 = vunpack.c.l.b16 %v89
    %v260 = vunpack.c.h.b16 %v89
    %v261 = vunpack.c.l.b16 %v90
    %v262 = vunpack.c.h.b16 %v90
    %v263 = vunpack.c.l.b16 %v91
    %v264 = vunpack.c.h.b16 %v91
    %v265 = vunpack.c.l.b16 %v92
    %v266 = vunpack.c.h.b16 %v92
    %v267 = vunpack.c.l.b16 %v93
    %v268 = vunpack.c.h.b16 %v93
    %v269 = vunpack.c.l.b16 %v94
    %v270 = vunpack.c.h.b16 %v94
    %v271 = vunpack.c.l.b16 %v95
    %v272 = vunpack.c.h.b16 %v95
    %v273 = vunpack.c.l.b16 %v96
    %v274 = vunpack.c.h.b16 %v96
    %v275 = vunpack.c.l.b16 %v97
    %v276 = vunpack.c.h.b16 %v97
    %v277 = vunpack.c.l.b16 %v98
    %v278 = vunpack.c.h.b16 %v98
    %v279 = vunpack.c.l.b16 %v99
    %v280 = vunpack.c.h.b16 %v99
    %v281 = vunpack.c.l.b16 %v100
    %v282 = vunpack.c.h.b16 %v100
    %v283 = vunpack.c.l.b16 %v101
    %v284 = vunpack.c.h.b16 %v101
    %v285 = vunpack.c.l.b16 %v102
    %v286 = vunpack.c.h.b16 %v102
    %v287 = vunpack.c.l.b16 %v103
    %v288 = vunpack.c.h.b16 %v103
    %v289 = vunpack.c.l.b16 %v104
    %v290 = vunpack.c.h.b16 %v104
    %v291 = vunpack.c.l.b16 %v105
    %v292 = vunpack.c.h.b16 %v105
    %v293 = vunpack.c.l.b16 %v106
    %v294 = vunpack.c.h.b16 %v106
    %v295 = vunpack.c.l.b16 %v107
    %v296 = vunpack.c.h.b16 %v107
    %v297 = vunpack.c.l.b16 %v108
    %v298 = vunpack.c.h.b16 %v108
    %v299 = vunpack.c.l.b16 %v109
    %v300 = vunpack.c.h.b16 %v109
    %v301 = vunpack.c.l.b16 %v110
    %v302 = vunpack.c.h.b16 %v110
    %v303 = vunpack.c.l.b16 %v111
    %v304 = vunpack.c.h.b16 %v111
    %v305 = vunpack.c.l.b16 %v112
    %v306 = vunpack.c.h.b16 %v112
    %v307 = vunpack.c.l.b16 %v113
    %v308 = vunpack.c.h.b16 %v113
    %v309 = vunpack.c.l.b16 %v114
    %v310 = vunpack.c.h.b16 %v114
    %v311 = vunpack.c.l.b16 %v115
    %v312 = vunpack.c.h.b16 %v115
    %v313 = vunpack.c.l.b16 %v116
    %v314 = vunpack.c.h.b16 %v116
    %v315 = vunpack.c.l.b16 %v117
    %v316 = vunpack.c.h.b16 %v117
    %v317 = vunpack.c.l.b16 %v118
    %v318 = vunpack.c.h.b16 %v118
    %v319 = vpack.c.b16 %v229, %v223
    %v320 = vpack.c.b16 %v230, %v224
    %v321 = vpack.c.b16 %v231, %v225
    %v322 = vpack.c.b16 %v232, %v226
    %v323 = vpack.c.b16 %v233, %v227
    %v324 = vpack.c.b16 %v234, %v228
    %v325 = vpack.c.b16 %v241, %v235
    %v326 = vpack.c.b16 %v242, %v236
    %v327 = vpack.c.b16 %v243, %v237
    %v328 = vpack.c.b16 %v244, %v238
    %v329 = vpack.c.b16 %v245, %v239
    %v330 = vpack.c.b16 %v246, %v240
    %v331 = vpack.c.b16 %v253, %v247
    %v332 = vpack.c.b16 %v254, %v248
    %v333 = vpack.c.b16 %v255, %v249
    %v334 = vpack.c.b16 %v256, %v250
    %v335 = vpack.c.b16 %v257, %v251
    %v336 = vpack.c.b16 %v258, %v252
    %v337 = vpack.c.b16 %v265, %v259
    %v338 = vpack.c.b16 %v266, %v260
    %v339 = vpack.c.b16 %v267, %v261
    %v340 = vpack.c.b16 %v268, %v262
    %v341 = vpack.c.b16 %v269, %v263
    %v342 = vpack.c.b16 %v270, %v264
    %v343 = vpack.c.b16 %v277, %v271
    %v344 = vpack.c.b16 %v278, %v272
    %v345 = vpack.c.b16 %v279, %v273
    %v346 = vpack.c.b16 %v280, %v274
    %v347 = vpack.c.b16 %v281, %v275
    %v348 = vpack.c.b16 %v282, %v276
    %v349 = vpack.c.b16 %v289, %v283
    %v350 = vpack.c.b16 %v290, %v284
    %v351 = vpack.c.b16 %v291, %v285
    %v352 = vpack.c.b16 %v292, %v286
    %v353 = vpack.c.b16 %v293, %v287
    %v354 = vpack.c.b16 %v294, %v288
    %v355 = vpack.c.b16 %v301, %v295
    %v356 = vpack.c.b16 %v302, %v296
    %v357 = vpack.c.b16 %v303, %v297
    %v358 = vpack.c.b16 %v304, %v298
    %v359 = vpack.c.b16 %v305, %v299
    %v360 = vpack.c.b16 %v306, %v300
    %v361 = vpack.c.b16 %v313, %v307
    %v362 = vpack.c.b16 %v314, %v308
    %v363 = vpack.c.b16 %v315, %v309
    %v364 = vpack.c.b16 %v316, %v310
    %v365 = vpack.c.b16 %v317, %v311
    %v366 = vpack.c.b16 %v318, %v312
    %415 = vmatprep.subr.bf16.mxu0 %v320
    %416 = vmatpush1.bf16.msra.mxu0 %v319
    %417 = vmatprep.subr.bf16.mxu0 %v326
    %418 = vmatpush1.bf16.msra.mxu0 %v325
    %419 = vmatprep.subr.bf16.mxu0 %v332
    %420 = vmatpush1.bf16.msra.mxu0 %v331
    %421 = vmatprep.subr.bf16.mxu0 %v338
    %422 = vmatpush1.bf16.msra.mxu0 %v337
    %423 = vmatprep.subr.bf16.mxu0 %v344
    %424 = vmatpush1.bf16.msra.mxu0 %v343
    %425 = vmatprep.subr.bf16.mxu0 %v350
    %426 = vmatpush1.bf16.msra.mxu0 %v349
    %427 = vmatprep.subr.bf16.mxu0 %v356
    %428 = vmatpush1.bf16.msra.mxu0 %v355
    %429 = vmatprep.subr.bf16.mxu0 %v362
    %430 = vmatpush1.bf16.msra.mxu0 %v361
    %431 = vmatprep.subr.bf16.mxu0 0
    %432 = vmatpush1.bf16.msra.mxu0 0
    %433 = vmatprep.subr.bf16.mxu0 0
    %434 = vmatpush1.bf16.msra.mxu0 0
    %435 = vmatprep.subr.bf16.mxu0 0
    %436 = vmatpush1.bf16.msra.mxu0 0
    %437 = vmatprep.subr.bf16.mxu0 0
    %438 = vmatpush1.bf16.msra.mxu0 0
    %439 = vmatprep.subr.bf16.mxu0 0
    %440 = vmatpush1.bf16.msra.mxu0 0
    %441 = vmatprep.subr.bf16.mxu0 0
    %442 = vmatpush1.bf16.msra.mxu0 0
    %443 = vmatprep.subr.bf16.mxu0 0
    %444 = vmatpush1.bf16.msra.mxu0 0
    %445 = vmatprep.subr.bf16.mxu0 0
    %446 = vmatpush1.bf16.msra.mxu0 0
    %447 = vmatprep.mubr.bf16.mxu0 0
    %448 = vmatmul.mubr.bf16.gmra.mrb[0].mxu0 %v167
    %v449 = vpop.f32.mrb[0].mxu0
    %v450 = vadd.f32 %v124, %v449
    %v451 = vpop.f32.mrb[0].mxu0
    %v452 = vadd.f32 %v128, %v451
    %v453 = vpop.f32.mrb[0].mxu0
    %v454 = vadd.f32 %v124, %v453
    %v455 = vpop.f32.mrb[0].mxu0
    %v456 = vadd.f32 %v128, %v455
    %457 = vmatprep.mubr.bf16.mxu0 0
    %458 = vmatmul.mubr.bf16.gmra.mrb[0].mxu0 %v168
    %v459 = vpop.f32.mrb[0].mxu0
    %v460 = vadd.f32 %v124, %v459
    %v461 = vpop.f32.mrb[0].mxu0
    %v462 = vadd.f32 %v128, %v461
    %v463 = vpop.f32.mrb[0].mxu0
    %v464 = vadd.f32 %v124, %v463
    %v465 = vpop.f32.mrb[0].mxu0
    %v466 = vadd.f32 %v128, %v465
    %467 = vmatprep.mubr.bf16.mxu0 0
    %468 = vmatmul.mubr.bf16.gmra.mrb[0].mxu0 %v169
    %v469 = vpop.f32.mrb[0].mxu0
    %v470 = vadd.f32 %v124, %v469
    %v471 = vpop.f32.mrb[0].mxu0
    %v472 = vadd.f32 %v128, %v471
    %v473 = vpop.f32.mrb[0].mxu0
    %v474 = vadd.f32 %v124, %v473
    %v475 = vpop.f32.mrb[0].mxu0
    %v476 = vadd.f32 %v128, %v475
    %477 = vmatprep.mubr.bf16.mxu0 0
    %478 = vmatmul.mubr.bf16.gmra.mrb[0].mxu0 %v170
    %v479 = vpop.f32.mrb[0].mxu0
    %v480 = vadd.f32 %v124, %v479
    %v481 = vpop.f32.mrb[0].mxu0
    %v482 = vadd.f32 %v128, %v481
    %v483 = vpop.f32.mrb[0].mxu0
    %v484 = vadd.f32 %v124, %v483
    %v485 = vpop.f32.mrb[0].mxu0
    %v486 = vadd.f32 %v128, %v485
    %487 = vdwg.mxu0
    %488 = vmatprep.subr.bf16.mxu0 %v322
    %489 = vmatpush1.bf16.msra.mxu0 %v321
    %490 = vmatprep.subr.bf16.mxu0 %v328
    %491 = vmatpush1.bf16.msra.mxu0 %v327
    %492 = vmatprep.subr.bf16.mxu0 %v334
    %493 = vmatpush1.bf16.msra.mxu0 %v333
    %494 = vmatprep.subr.bf16.mxu0 %v340
    %495 = vmatpush1.bf16.msra.mxu0 %v339
    %496 = vmatprep.subr.bf16.mxu0 %v346
    %497 = vmatpush1.bf16.msra.mxu0 %v345
    %498 = vmatprep.subr.bf16.mxu0 %v352
    %499 = vmatpush1.bf16.msra.mxu0 %v351
    %500 = vmatprep.subr.bf16.mxu0 %v358
    %501 = vmatpush1.bf16.msra.mxu0 %v357
    %502 = vmatprep.subr.bf16.mxu0 %v364
    %503 = vmatpush1.bf16.msra.mxu0 %v363
    %504 = vmatprep.subr.bf16.mxu0 0
    %505 = vmatpush1.bf16.msra.mxu0 0
    %506 = vmatprep.subr.bf16.mxu0 0
    %507 = vmatpush1.bf16.msra.mxu0 0
    %508 = vmatprep.subr.bf16.mxu0 0
    %509 = vmatpush1.bf16.msra.mxu0 0
    %510 = vmatprep.subr.bf16.mxu0 0
    %511 = vmatpush1.bf16.msra.mxu0 0
    %512 = vmatprep.subr.bf16.mxu0 0
    %513 = vmatpush1.bf16.msra.mxu0 0
    %514 = vmatprep.subr.bf16.mxu0 0
    %515 = vmatpush1.bf16.msra.mxu0 0
    %516 = vmatprep.subr.bf16.mxu0 0
    %517 = vmatpush1.bf16.msra.mxu0 0
    %518 = vmatprep.subr.bf16.mxu0 0
    %519 = vmatpush1.bf16.msra.mxu0 0
    %520 = vmatprep.mubr.bf16.mxu0 0
    %521 = vmatmul.mubr.bf16.gmra.mrb[0].mxu0 %v167
    %v522 = vpop.f32.mrb[0].mxu0
    %v523 = vadd.f32 %v132, %v522
    %v524 = vpop.f32.mrb[0].mxu0
    %v525 = vadd.f32 %v136, %v524
    %v526 = vpop.f32.mrb[0].mxu0
    %v527 = vadd.f32 %v132, %v526
    %v528 = vpop.f32.mrb[0].mxu0
    %v529 = vadd.f32 %v136, %v528
    %530 = vmatprep.mubr.bf16.mxu0 0
    %531 = vmatmul.mubr.bf16.gmra.mrb[0].mxu0 %v168
    %v532 = vpop.f32.mrb[0].mxu0
    %v533 = vadd.f32 %v132, %v532
    %v534 = vpop.f32.mrb[0].mxu0
    %v535 = vadd.f32 %v136, %v534
    %v536 = vpop.f32.mrb[0].mxu0
    %v537 = vadd.f32 %v132, %v536
    %v538 = vpop.f32.mrb[0].mxu0
    %v539 = vadd.f32 %v136, %v538
    %540 = vmatprep.mubr.bf16.mxu0 0
    %541 = vmatmul.mubr.bf16.gmra.mrb[0].mxu0 %v169
    %v542 = vpop.f32.mrb[0].mxu0
    %v543 = vadd.f32 %v132, %v542
    %v544 = vpop.f32.mrb[0].mxu0
    %v545 = vadd.f32 %v136, %v544
    %v546 = vpop.f32.mrb[0].mxu0
    %v547 = vadd.f32 %v132, %v546
    %v548 = vpop.f32.mrb[0].mxu0
    %v549 = vadd.f32 %v136, %v548
    %550 = vmatprep.mubr.bf16.mxu0 0
    %551 = vmatmul.mubr.bf16.gmra.mrb[0].mxu0 %v170
    %v552 = vpop.f32.mrb[0].mxu0
    %v553 = vadd.f32 %v132, %v552
    %v554 = vpop.f32.mrb[0].mxu0
    %v555 = vadd.f32 %v136, %v554
    %v556 = vpop.f32.mrb[0].mxu0
    %v557 = vadd.f32 %v132, %v556
    %v558 = vpop.f32.mrb[0].mxu0
    %v559 = vadd.f32 %v136, %v558
    %560 = vdwg.mxu0
    %561 = vmatprep.subr.bf16.mxu0 %v324
    %562 = vmatpush1.bf16.msra.mxu0 %v323
    %563 = vmatprep.subr.bf16.mxu0 %v330
    %564 = vmatpush1.bf16.msra.mxu0 %v329
    %565 = vmatprep.subr.bf16.mxu0 %v336
    %566 = vmatpush1.bf16.msra.mxu0 %v335
    %567 = vmatprep.subr.bf16.mxu0 %v342
    %568 = vmatpush1.bf16.msra.mxu0 %v341
    %569 = vmatprep.subr.bf16.mxu0 %v348
    %570 = vmatpush1.bf16.msra.mxu0 %v347
    %571 = vmatprep.subr.bf16.mxu0 %v354
    %572 = vmatpush1.bf16.msra.mxu0 %v353
    %573 = vmatprep.subr.bf16.mxu0 %v360
    %574 = vmatpush1.bf16.msra.mxu0 %v359
    %575 = vmatprep.subr.bf16.mxu0 %v366
    %576 = vmatpush1.bf16.msra.mxu0 %v365
    %577 = vmatprep.subr.bf16.mxu0 0
    %578 = vmatpush1.bf16.msra.mxu0 0
    %579 = vmatprep.subr.bf16.mxu0 0
    %580 = vmatpush1.bf16.msra.mxu0 0
    %581 = vmatprep.subr.bf16.mxu0 0
    %582 = vmatpush1.bf16.msra.mxu0 0
    %583 = vmatprep.subr.bf16.mxu0 0
    %584 = vmatpush1.bf16.msra.mxu0 0
    %585 = vmatprep.subr.bf16.mxu0 0
    %586 = vmatpush1.bf16.msra.mxu0 0
    %587 = vmatprep.subr.bf16.mxu0 0
    %588 = vmatpush1.bf16.msra.mxu0 0
    %589 = vmatprep.subr.bf16.mxu0 0
    %590 = vmatpush1.bf16.msra.mxu0 0
    %591 = vmatprep.subr.bf16.mxu0 0
    %592 = vmatpush1.bf16.msra.mxu0 0
    %593 = vmatprep.mubr.bf16.mxu0 0
    %594 = vmatmul.mubr.bf16.gmra.mrb[0].mxu0 %v167
    %v595 = vpop.f32.mrb[0].mxu0
    %v596 = vadd.f32 %v140, %v595
    %v597 = vpop.f32.mrb[0].mxu0
    %v598 = vadd.f32 %v144, %v597
    %v599 = vpop.f32.mrb[0].mxu0
    %v600 = vadd.f32 %v140, %v599
    %v601 = vpop.f32.mrb[0].mxu0
    %v602 = vadd.f32 %v144, %v601
    %603 = vmatprep.mubr.bf16.mxu0 0
    %604 = vmatmul.mubr.bf16.gmra.mrb[0].mxu0 %v168
    %v605 = vpop.f32.mrb[0].mxu0
    %v606 = vadd.f32 %v140, %v605
    %v607 = vpop.f32.mrb[0].mxu0
    %v608 = vadd.f32 %v144, %v607
    %v609 = vpop.f32.mrb[0].mxu0
    %v610 = vadd.f32 %v140, %v609
    %v611 = vpop.f32.mrb[0].mxu0
    %v612 = vadd.f32 %v144, %v611
    %613 = vmatprep.mubr.bf16.mxu0 0
    %614 = vmatmul.mubr.bf16.gmra.mrb[0].mxu0 %v169
    %v615 = vpop.f32.mrb[0].mxu0
    %v616 = vadd.f32 %v140, %v615
    %v617 = vpop.f32.mrb[0].mxu0
    %v618 = vadd.f32 %v144, %v617
    %v619 = vpop.f32.mrb[0].mxu0
    %v620 = vadd.f32 %v140, %v619
    %v621 = vpop.f32.mrb[0].mxu0
    %v622 = vadd.f32 %v144, %v621
    %623 = vmatprep.mubr.bf16.mxu0 0
    %624 = vmatmul.mubr.bf16.gmra.mrb[0].mxu0 %v170
    %v625 = vpop.f32.mrb[0].mxu0
    %v626 = vadd.f32 %v140, %v625
    %v627 = vpop.f32.mrb[0].mxu0
    %v628 = vadd.f32 %v144, %v627
    %v629 = vpop.f32.mrb[0].mxu0
    %v630 = vadd.f32 %v140, %v629
    %v631 = vpop.f32.mrb[0].mxu0
    %v632 = vadd.f32 %v144, %v631
    %633 = vdwg.mxu0
    %634 = vst [vmem:[#allocation2] sm:$0xff] %v450
    %635 = vst [vmem:[#allocation2 + $0x8] sm:$0xff] %v452
    %636 = vst [vmem:[#allocation2 + $0x10] sm:$0xff] %v523
    %637 = vst [vmem:[#allocation2 + $0x18] sm:$0xff] %v525
    %638 = vst [vmem:[#allocation2 + $0x20] sm:$0xff] %v596
    %639 = vst [vmem:[#allocation2 + $0x28] sm:$0xff] %v598
    %640 = vst [vmem:[#allocation2 + $0x30] sm:$0xff] %v454
    %641 = vst [vmem:[#allocation2 + $0x38] sm:$0xff] %v456
    %642 = vst [vmem:[#allocation2 + $0x40] sm:$0xff] %v527
    %643 = vst [vmem:[#allocation2 + $0x48] sm:$0xff] %v529
    %644 = vst [vmem:[#allocation2 + $0x50] sm:$0xff] %v600
    %645 = vst [vmem:[#allocation2 + $0x58] sm:$0xff] %v602
    %646 = vst [vmem:[#allocation2 + $0x60] sm:$0xff] %v460
    %647 = vst [vmem:[#allocation2 + $0x68] sm:$0xff] %v462
    %648 = vst [vmem:[#allocation2 + $0x70] sm:$0xff] %v533
    %649 = vst [vmem:[#allocation2 + $0x78] sm:$0xff] %v535
    %650 = vst [vmem:[#allocation2 + $0x80] sm:$0xff] %v606
    %651 = vst [vmem:[#allocation2 + $0x88] sm:$0xff] %v608
    %652 = vst [vmem:[#allocation2 + $0x90] sm:$0xff] %v464
    %653 = vst [vmem:[#allocation2 + $0x98] sm:$0xff] %v466
    %654 = vst [vmem:[#allocation2 + $0xa0] sm:$0xff] %v537
    %655 = vst [vmem:[#allocation2 + $0xa8] sm:$0xff] %v539
    %656 = vst [vmem:[#allocation2 + $0xb0] sm:$0xff] %v610
    %657 = vst [vmem:[#allocation2 + $0xb8] sm:$0xff] %v612
    %658 = vst [vmem:[#allocation2 + $0xc0] sm:$0xff] %v470
    %659 = vst [vmem:[#allocation2 + $0xc8] sm:$0xff] %v472
    %660 = vst [vmem:[#allocation2 + $0xd0] sm:$0xff] %v543
    %661 = vst [vmem:[#allocation2 + $0xd8] sm:$0xff] %v545
    %662 = vst [vmem:[#allocation2 + $0xe0] sm:$0xff] %v616
    %663 = vst [vmem:[#allocation2 + $0xe8] sm:$0xff] %v618
    %664 = vst [vmem:[#allocation2 + $0xf0] sm:$0xff] %v474
    %665 = vst [vmem:[#allocation2 + $0xf8] sm:$0xff] %v476
    %666 = vst [vmem:[#allocation2 + $0x100] sm:$0xff] %v547
    %667 = vst [vmem:[#allocation2 + $0x108] sm:$0xff] %v549
    %668 = vst [vmem:[#allocation2 + $0x110] sm:$0xff] %v620
    %669 = vst [vmem:[#allocation2 + $0x118] sm:$0xff] %v622
    %670 = vst [vmem:[#allocation2 + $0x120] sm:$0xff] %v480
    %671 = vst [vmem:[#allocation2 + $0x128] sm:$0xff] %v482
    %672 = vst [vmem:[#allocation2 + $0x130] sm:$0xff] %v553
    %673 = vst [vmem:[#allocation2 + $0x138] sm:$0xff] %v555
    %674 = vst [vmem:[#allocation2 + $0x140] sm:$0xff] %v626
    %675 = vst [vmem:[#allocation2 + $0x148] sm:$0xff] %v628
    %676 = vst [vmem:[#allocation2 + $0x150] sm:$0xff] %v484
    %677 = vst [vmem:[#allocation2 + $0x158] sm:$0xff] %v486
    %678 = vst [vmem:[#allocation2 + $0x160] sm:$0xff] %v557
    %679 = vst [vmem:[#allocation2 + $0x168] sm:$0xff] %v559
    %680 = vst [vmem:[#allocation2 + $0x170] sm:$0xff] %v630
    %681 = vst [vmem:[#allocation2 + $0x178] sm:$0xff] %v632
    %v682 = vld [vmem:[#allocation8] sm:$0xff]
    %v683 = vld [vmem:[#allocation8 + $0x8] sm:$0xff]
    %v684 = vld [vmem:[#allocation8 + $0x10] sm:$0xff]
    %v685 = vld [vmem:[#allocation8 + $0x18] sm:$0xff]
    %v686 = vld [vmem:[#allocation8 + $0x20] sm:$0xff]
    %v687 = vld [vmem:[#allocation8 + $0x28] sm:$0xff]
    %v688 = vld [vmem:[#allocation8 + $0x30] sm:$0xff]
    %v689 = vld [vmem:[#allocation8 + $0x38] sm:$0xff]
    %v690 = vld [vmem:[#allocation8 + $0x40] sm:$0xff]
    %v691 = vld [vmem:[#allocation8 + $0x48] sm:$0xff]
    %v692 = vld [vmem:[#allocation8 + $0x50] sm:$0xff]
    %v693 = vld [vmem:[#allocation8 + $0x58] sm:$0xff]
    %v694 = vld [vmem:[#allocation8 + $0x60] sm:$0xff]
    %v695 = vld [vmem:[#allocation8 + $0x68] sm:$0xff]
    %v696 = vld [vmem:[#allocation8 + $0x70] sm:$0xff]
    %v697 = vld [vmem:[#allocation8 + $0x78] sm:$0xff]
    %v698 = vld [vmem:[#allocation8 + $0x80] sm:$0xff]
    %v699 = vld [vmem:[#allocation8 + $0x88] sm:$0xff]
    %v700 = vld [vmem:[#allocation8 + $0x90] sm:$0xff]
    %v701 = vld [vmem:[#allocation8 + $0x98] sm:$0xff]
    %v702 = vld [vmem:[#allocation8 + $0xa0] sm:$0xff]
    %v703 = vld [vmem:[#allocation8 + $0xa8] sm:$0xff]
    %v704 = vld [vmem:[#allocation8 + $0xb0] sm:$0xff]
    %v705 = vld [vmem:[#allocation8 + $0xb8] sm:$0xff]
    %v706 = vld [vmem:[#allocation8 + $0xc0] sm:$0xff]
    %v707 = vld [vmem:[#allocation8 + $0xc8] sm:$0xff]
    %v708 = vld [vmem:[#allocation8 + $0xd0] sm:$0xff]
    %v709 = vld [vmem:[#allocation8 + $0xd8] sm:$0xff]
    %v710 = vld [vmem:[#allocation8 + $0xe0] sm:$0xff]
    %v711 = vld [vmem:[#allocation8 + $0xe8] sm:$0xff]
    %v712 = vld [vmem:[#allocation8 + $0xf0] sm:$0xff]
    %v713 = vld [vmem:[#allocation8 + $0xf8] sm:$0xff]
    %v714 = vld [vmem:[#allocation8 + $0x100] sm:$0xff]
    %v715 = vld [vmem:[#allocation8 + $0x108] sm:$0xff]
    %v716 = vld [vmem:[#allocation8 + $0x110] sm:$0xff]
    %v717 = vld [vmem:[#allocation8 + $0x118] sm:$0xff]
    %v718 = vld [vmem:[#allocation8 + $0x120] sm:$0xff]
    %v719 = vld [vmem:[#allocation8 + $0x128] sm:$0xff]
    %v720 = vld [vmem:[#allocation8 + $0x130] sm:$0xff]
    %v721 = vld [vmem:[#allocation8 + $0x138] sm:$0xff]
    %v722 = vld [vmem:[#allocation8 + $0x140] sm:$0xff]
    %v723 = vld [vmem:[#allocation8 + $0x148] sm:$0xff]
    %v724 = vld [vmem:[#allocation8 + $0x150] sm:$0xff]
    %v725 = vld [vmem:[#allocation8 + $0x158] sm:$0xff]
    %v726 = vld [vmem:[#allocation8 + $0x160] sm:$0xff]
    %v727 = vld [vmem:[#allocation8 + $0x168] sm:$0xff]
    %v728 = vld [vmem:[#allocation8 + $0x170] sm:$0xff]
    %v729 = vld [vmem:[#allocation8 + $0x178] sm:$0xff]
    %v730 = vld [vmem:[#allocation8 + $0x180] sm:$0xff]
    %v731 = vld [vmem:[#allocation8 + $0x188] sm:$0xff]
    %v732 = vld [vmem:[#allocation8 + $0x190] sm:$0xff]
    %v733 = vld [vmem:[#allocation8 + $0x198] sm:$0xff]
    %v734 = vld [vmem:[#allocation8 + $0x1a0] sm:$0xff]
    %v735 = vld [vmem:[#allocation8 + $0x1a8] sm:$0xff]
    %v736 = vld [vmem:[#allocation8 + $0x1b0] sm:$0xff]
    %v737 = vld [vmem:[#allocation8 + $0x1b8] sm:$0xff]
    %v738 = vld [vmem:[#allocation8 + $0x1c0] sm:$0xff]
    %v739 = vld [vmem:[#allocation8 + $0x1c8] sm:$0xff]
    %v740 = vld [vmem:[#allocation8 + $0x1d0] sm:$0xff]
    %v741 = vld [vmem:[#allocation8 + $0x1d8] sm:$0xff]
    %v742 = vld [vmem:[#allocation8 + $0x1e0] sm:$0xff]
    %v743 = vld [vmem:[#allocation8 + $0x1e8] sm:$0xff]
    %v744 = vld [vmem:[#allocation8 + $0x1f0] sm:$0xff]
    %v745 = vld [vmem:[#allocation8 + $0x1f8] sm:$0xff]
    %v746 = vld [vmem:[#allocation8 + $0x200] sm:$0xff]
    %v747 = vld [vmem:[#allocation8 + $0x208] sm:$0xff]
    %v748 = vld [vmem:[#allocation8 + $0x210] sm:$0xff]
    %v749 = vld [vmem:[#allocation8 + $0x218] sm:$0xff]
    %v750 = vld [vmem:[#allocation8 + $0x220] sm:$0xff]
    %v751 = vld [vmem:[#allocation8 + $0x228] sm:$0xff]
    %v752 = vld [vmem:[#allocation8 + $0x230] sm:$0xff]
    %v753 = vld [vmem:[#allocation8 + $0x238] sm:$0xff]
    %v754 = vld [vmem:[#allocation8 + $0x240] sm:$0xff]
    %v755 = vld [vmem:[#allocation8 + $0x248] sm:$0xff]
    %v756 = vld [vmem:[#allocation8 + $0x250] sm:$0xff]
    %v757 = vld [vmem:[#allocation8 + $0x258] sm:$0xff]
    %v758 = vld [vmem:[#allocation8 + $0x260] sm:$0xff]
    %v759 = vld [vmem:[#allocation8 + $0x268] sm:$0xff]
    %v760 = vld [vmem:[#allocation8 + $0x270] sm:$0xff]
    %v761 = vld [vmem:[#allocation8 + $0x278] sm:$0xff]
    %v762 = vld [vmem:[#allocation8 + $0x280] sm:$0xff]
    %v763 = vld [vmem:[#allocation8 + $0x288] sm:$0xff]
    %v764 = vld [vmem:[#allocation8 + $0x290] sm:$0xff]
    %v765 = vld [vmem:[#allocation8 + $0x298] sm:$0xff]
    %v766 = vld [vmem:[#allocation8 + $0x2a0] sm:$0xff]
    %v767 = vld [vmem:[#allocation8 + $0x2a8] sm:$0xff]
    %v768 = vld [vmem:[#allocation8 + $0x2b0] sm:$0xff]
    %v769 = vld [vmem:[#allocation8 + $0x2b8] sm:$0xff]
    %v770 = vld [vmem:[#allocation8 + $0x2c0] sm:$0xff]
    %v771 = vld [vmem:[#allocation8 + $0x2c8] sm:$0xff]
    %v772 = vld [vmem:[#allocation8 + $0x2d0] sm:$0xff]
    %v773 = vld [vmem:[#allocation8 + $0x2d8] sm:$0xff]
    %v774 = vld [vmem:[#allocation8 + $0x2e0] sm:$0xff]
    %v775 = vld [vmem:[#allocation8 + $0x2e8] sm:$0xff]
    %v776 = vld [vmem:[#allocation8 + $0x2f0] sm:$0xff]
    %v777 = vld [vmem:[#allocation8 + $0x2f8] sm:$0xff]
    %v778 = vld [vmem:[%s4] sm:$0x3f]
    %v780 = vlaneseq
    %v781 = vshrl.u32 %v780, 7
    %v782 = vsub.s32 0, %v781
    %v783 = vrot.slane %v778, %v782
    %v784 = vlaneseq
    %v785 = vshrl.u32 %v784, 7
    %v786 = vsub.s32 1, %v785
    %v787 = vrot.slane %v778, %v786
    %v788 = vlaneseq
    %v789 = vshrl.u32 %v788, 7
    %v790 = vsub.s32 2, %v789
    %v791 = vrot.slane %v778, %v790
    %v792 = vlaneseq
    %v793 = vshrl.u32 %v792, 7
    %v794 = vsub.s32 3, %v793
    %v795 = vrot.slane %v778, %v794
    %v796 = vlaneseq
    %v797 = vshrl.u32 %v796, 7
    %v798 = vsub.s32 4, %v797
    %v799 = vrot.slane %v778, %v798
    %v800 = vlaneseq
    %v801 = vshrl.u32 %v800, 7
    %v802 = vsub.s32 5, %v801
    %v803 = vrot.slane %v778, %v802
    %s810 = smul.u32 0, 6
    %s811 = smul.addr %s810, 8
    %s812 = scalar_lea.vmem [#allocation2], %s811
    %v813 = vld [vmem:[%s812] sm:$0xff]
    %v814 = vld [vmem:[%s812 + $0x8] sm:$0xff]
    %v815 = vld [vmem:[%s812 + $0x10] sm:$0xff]
    %v816 = vld [vmem:[%s812 + $0x18] sm:$0xff]
    %v817 = vld [vmem:[%s812 + $0x20] sm:$0xff]
    %v818 = vld [vmem:[%s812 + $0x28] sm:$0xff]
    %v915 = vunpack.c.l.b16 %v682
    %v916 = vunpack.c.h.b16 %v682
    %v917 = vunpack.c.l.b16 %v683
    %v918 = vunpack.c.h.b16 %v683
    %v919 = vunpack.c.l.b16 %v684
    %v920 = vunpack.c.h.b16 %v684
    %v921 = vunpack.c.l.b16 %v685
    %v922 = vunpack.c.h.b16 %v685
    %v923 = vunpack.c.l.b16 %v686
    %v924 = vunpack.c.h.b16 %v686
    %v925 = vunpack.c.l.b16 %v687
    %v926 = vunpack.c.h.b16 %v687
    %v927 = vunpack.c.l.b16 %v688
    %v928 = vunpack.c.h.b16 %v688
    %v929 = vunpack.c.l.b16 %v689
    %v930 = vunpack.c.h.b16 %v689
    %v931 = vunpack.c.l.b16 %v690
    %v932 = vunpack.c.h.b16 %v690
    %v933 = vunpack.c.l.b16 %v691
    %v934 = vunpack.c.h.b16 %v691
    %v935 = vunpack.c.l.b16 %v692
    %v936 = vunpack.c.h.b16 %v692
    %v937 = vunpack.c.l.b16 %v693
    %v938 = vunpack.c.h.b16 %v693
    %v939 = vunpack.c.l.b16 %v694
    %v940 = vunpack.c.h.b16 %v694
    %v941 = vunpack.c.l.b16 %v695
    %v942 = vunpack.c.h.b16 %v695
    %v943 = vunpack.c.l.b16 %v696
    %v944 = vunpack.c.h.b16 %v696
    %v945 = vunpack.c.l.b16 %v697
    %v946 = vunpack.c.h.b16 %v697
    %v947 = vunpack.c.l.b16 %v698
    %v948 = vunpack.c.h.b16 %v698
    %v949 = vunpack.c.l.b16 %v699
    %v950 = vunpack.c.h.b16 %v699
    %v951 = vunpack.c.l.b16 %v700
    %v952 = vunpack.c.h.b16 %v700
    %v953 = vunpack.c.l.b16 %v701
    %v954 = vunpack.c.h.b16 %v701
    %v955 = vunpack.c.l.b16 %v702
    %v956 = vunpack.c.h.b16 %v702
    %v957 = vunpack.c.l.b16 %v703
    %v958 = vunpack.c.h.b16 %v703
    %v959 = vunpack.c.l.b16 %v704
    %v960 = vunpack.c.h.b16 %v704
    %v961 = vunpack.c.l.b16 %v705
    %v962 = vunpack.c.h.b16 %v705
    %v963 = vunpack.c.l.b16 %v706
    %v964 = vunpack.c.h.b16 %v706
    %v965 = vunpack.c.l.b16 %v707
    %v966 = vunpack.c.h.b16 %v707
    %v967 = vunpack.c.l.b16 %v708
    %v968 = vunpack.c.h.b16 %v708
    %v969 = vunpack.c.l.b16 %v709
    %v970 = vunpack.c.h.b16 %v709
    %v971 = vunpack.c.l.b16 %v710
    %v972 = vunpack.c.h.b16 %v710
    %v973 = vunpack.c.l.b16 %v711
    %v974 = vunpack.c.h.b16 %v711
    %v975 = vunpack.c.l.b16 %v712
    %v976 = vunpack.c.h.b16 %v712
    %v977 = vunpack.c.l.b16 %v713
    %v978 = vunpack.c.h.b16 %v713
    %v979 = vunpack.c.l.b16 %v714
    %v980 = vunpack.c.h.b16 %v714
    %v981 = vunpack.c.l.b16 %v715
    %v982 = vunpack.c.h.b16 %v715
    %v983 = vunpack.c.l.b16 %v716
    %v984 = vunpack.c.h.b16 %v716
    %v985 = vunpack.c.l.b16 %v717
    %v986 = vunpack.c.h.b16 %v717
    %v987 = vunpack.c.l.b16 %v718
    %v988 = vunpack.c.h.b16 %v718
    %v989 = vunpack.c.l.b16 %v719
    %v990 = vunpack.c.h.b16 %v719
    %v991 = vunpack.c.l.b16 %v720
    %v992 = vunpack.c.h.b16 %v720
    %v993 = vunpack.c.l.b16 %v721
    %v994 = vunpack.c.h.b16 %v721
    %v995 = vunpack.c.l.b16 %v722
    %v996 = vunpack.c.h.b16 %v722
    %v997 = vunpack.c.l.b16 %v723
    %v998 = vunpack.c.h.b16 %v723
    %v999 = vunpack.c.l.b16 %v724
    %v1000 = vunpack.c.h.b16 %v724
    %v1001 = vunpack.c.l.b16 %v725
    %v1002 = vunpack.c.h.b16 %v725
    %v1003 = vunpack.c.l.b16 %v726
    %v1004 = vunpack.c.h.b16 %v726
    %v1005 = vunpack.c.l.b16 %v727
    %v1006 = vunpack.c.h.b16 %v727
    %v1007 = vunpack.c.l.b16 %v728
    %v1008 = vunpack.c.h.b16 %v728
    %v1009 = vunpack.c.l.b16 %v729
    %v1010 = vunpack.c.h.b16 %v729
    %v1011 = vunpack.c.l.b16 %v730
    %v1012 = vunpack.c.h.b16 %v730
    %v1013 = vunpack.c.l.b16 %v731
    %v1014 = vunpack.c.h.b16 %v731
    %v1015 = vunpack.c.l.b16 %v732
    %v1016 = vunpack.c.h.b16 %v732
    %v1017 = vunpack.c.l.b16 %v733
    %v1018 = vunpack.c.h.b16 %v733
    %v1019 = vunpack.c.l.b16 %v734
    %v1020 = vunpack.c.h.b16 %v734
    %v1021 = vunpack.c.l.b16 %v735
    %v1022 = vunpack.c.h.b16 %v735
    %v1023 = vunpack.c.l.b16 %v736
    %v1024 = vunpack.c.h.b16 %v736
    %v1025 = vunpack.c.l.b16 %v737
    %v1026 = vunpack.c.h.b16 %v737
    %v1027 = vunpack.c.l.b16 %v738
    %v1028 = vunpack.c.h.b16 %v738
    %v1029 = vunpack.c.l.b16 %v739
    %v1030 = vunpack.c.h.b16 %v739
    %v1031 = vunpack.c.l.b16 %v740
    %v1032 = vunpack.c.h.b16 %v740
    %v1033 = vunpack.c.l.b16 %v741
    %v1034 = vunpack.c.h.b16 %v741
    %v1035 = vunpack.c.l.b16 %v742
    %v1036 = vunpack.c.h.b16 %v742
    %v1037 = vunpack.c.l.b16 %v743
    %v1038 = vunpack.c.h.b16 %v743
    %v1039 = vunpack.c.l.b16 %v744
    %v1040 = vunpack.c.h.b16 %v744
    %v1041 = vunpack.c.l.b16 %v745
    %v1042 = vunpack.c.h.b16 %v745
    %v1043 = vunpack.c.l.b16 %v746
    %v1044 = vunpack.c.h.b16 %v746
    %v1045 = vunpack.c.l.b16 %v747
    %v1046 = vunpack.c.h.b16 %v747
    %v1047 = vunpack.c.l.b16 %v748
    %v1048 = vunpack.c.h.b16 %v748
    %v1049 = vunpack.c.l.b16 %v749
    %v1050 = vunpack.c.h.b16 %v749
    %v1051 = vunpack.c.l.b16 %v750
    %v1052 = vunpack.c.h.b16 %v750
    %v1053 = vunpack.c.l.b16 %v751
    %v1054 = vunpack.c.h.b16 %v751
    %v1055 = vunpack.c.l.b16 %v752
    %v1056 = vunpack.c.h.b16 %v752
    %v1057 = vunpack.c.l.b16 %v753
    %v1058 = vunpack.c.h.b16 %v753
    %v1059 = vunpack.c.l.b16 %v754
    %v1060 = vunpack.c.h.b16 %v754
    %v1061 = vunpack.c.l.b16 %v755
    %v1062 = vunpack.c.h.b16 %v755
    %v1063 = vunpack.c.l.b16 %v756
    %v1064 = vunpack.c.h.b16 %v756
    %v1065 = vunpack.c.l.b16 %v757
    %v1066 = vunpack.c.h.b16 %v757
    %v1067 = vunpack.c.l.b16 %v758
    %v1068 = vunpack.c.h.b16 %v758
    %v1069 = vunpack.c.l.b16 %v759
    %v1070 = vunpack.c.h.b16 %v759
    %v1071 = vunpack.c.l.b16 %v760
    %v1072 = vunpack.c.h.b16 %v760
    %v1073 = vunpack.c.l.b16 %v761
    %v1074 = vunpack.c.h.b16 %v761
    %v1075 = vunpack.c.l.b16 %v762
    %v1076 = vunpack.c.h.b16 %v762
    %v1077 = vunpack.c.l.b16 %v763
    %v1078 = vunpack.c.h.b16 %v763
    %v1079 = vunpack.c.l.b16 %v764
    %v1080 = vunpack.c.h.b16 %v764
    %v1081 = vunpack.c.l.b16 %v765
    %v1082 = vunpack.c.h.b16 %v765
    %v1083 = vunpack.c.l.b16 %v766
    %v1084 = vunpack.c.h.b16 %v766
    %v1085 = vunpack.c.l.b16 %v767
    %v1086 = vunpack.c.h.b16 %v767
    %v1087 = vunpack.c.l.b16 %v768
    %v1088 = vunpack.c.h.b16 %v768
    %v1089 = vunpack.c.l.b16 %v769
    %v1090 = vunpack.c.h.b16 %v769
    %v1091 = vunpack.c.l.b16 %v770
    %v1092 = vunpack.c.h.b16 %v770
    %v1093 = vunpack.c.l.b16 %v771
    %v1094 = vunpack.c.h.b16 %v771
    %v1095 = vunpack.c.l.b16 %v772
    %v1096 = vunpack.c.h.b16 %v772
    %v1097 = vunpack.c.l.b16 %v773
    %v1098 = vunpack.c.h.b16 %v773
    %v1099 = vunpack.c.l.b16 %v774
    %v1100 = vunpack.c.h.b16 %v774
    %v1101 = vunpack.c.l.b16 %v775
    %v1102 = vunpack.c.h.b16 %v775
    %v1103 = vunpack.c.l.b16 %v776
    %v1104 = vunpack.c.h.b16 %v776
    %v1105 = vunpack.c.l.b16 %v777
    %v1106 = vunpack.c.h.b16 %v777
    %v1107 = vpack.c.b16 %v921, %v915
    %v1108 = vpack.c.b16 %v922, %v916
    %v1109 = vpack.c.b16 %v923, %v917
    %v1110 = vpack.c.b16 %v924, %v918
    %v1111 = vpack.c.b16 %v925, %v919
    %v1112 = vpack.c.b16 %v926, %v920
    %v1113 = vpack.c.b16 %v933, %v927
    %v1114 = vpack.c.b16 %v934, %v928
    %v1115 = vpack.c.b16 %v935, %v929
    %v1116 = vpack.c.b16 %v936, %v930
    %v1117 = vpack.c.b16 %v937, %v931
    %v1118 = vpack.c.b16 %v938, %v932
    %v1119 = vpack.c.b16 %v945, %v939
    %v1120 = vpack.c.b16 %v946, %v940
    %v1121 = vpack.c.b16 %v947, %v941
    %v1122 = vpack.c.b16 %v948, %v942
    %v1123 = vpack.c.b16 %v949, %v943
    %v1124 = vpack.c.b16 %v950, %v944
    %v1125 = vpack.c.b16 %v957, %v951
    %v1126 = vpack.c.b16 %v958, %v952
    %v1127 = vpack.c.b16 %v959, %v953
    %v1128 = vpack.c.b16 %v960, %v954
    %v1129 = vpack.c.b16 %v961, %v955
    %v1130 = vpack.c.b16 %v962, %v956
    %v1131 = vpack.c.b16 %v969, %v963
    %v1132 = vpack.c.b16 %v970, %v964
    %v1133 = vpack.c.b16 %v971, %v965
    %v1134 = vpack.c.b16 %v972, %v966
    %v1135 = vpack.c.b16 %v973, %v967
    %v1136 = vpack.c.b16 %v974, %v968
    %v1137 = vpack.c.b16 %v981, %v975
    %v1138 = vpack.c.b16 %v982, %v976
    %v1139 = vpack.c.b16 %v983, %v977
    %v1140 = vpack.c.b16 %v984, %v978
    %v1141 = vpack.c.b16 %v985, %v979
    %v1142 = vpack.c.b16 %v986, %v980
    %v1143 = vpack.c.b16 %v993, %v987
    %v1144 = vpack.c.b16 %v994, %v988
    %v1145 = vpack.c.b16 %v995, %v989
    %v1146 = vpack.c.b16 %v996, %v990
    %v1147 = vpack.c.b16 %v997, %v991
    %v1148 = vpack.c.b16 %v998, %v992
    %v1149 = vpack.c.b16 %v1005, %v999
    %v1150 = vpack.c.b16 %v1006, %v1000
    %v1151 = vpack.c.b16 %v1007, %v1001
    %v1152 = vpack.c.b16 %v1008, %v1002
    %v1153 = vpack.c.b16 %v1009, %v1003
    %v1154 = vpack.c.b16 %v1010, %v1004
    %v1155 = vpack.c.b16 %v1017, %v1011
    %v1156 = vpack.c.b16 %v1018, %v1012
    %v1157 = vpack.c.b16 %v1019, %v1013
    %v1158 = vpack.c.b16 %v1020, %v1014
    %v1159 = vpack.c.b16 %v1021, %v1015
    %v1160 = vpack.c.b16 %v1022, %v1016
    %v1161 = vpack.c.b16 %v1029, %v1023
    %v1162 = vpack.c.b16 %v1030, %v1024
    %v1163 = vpack.c.b16 %v1031, %v1025
    %v1164 = vpack.c.b16 %v1032, %v1026
    %v1165 = vpack.c.b16 %v1033, %v1027
    %v1166 = vpack.c.b16 %v1034, %v1028
    %v1167 = vpack.c.b16 %v1041, %v1035
    %v1168 = vpack.c.b16 %v1042, %v1036
    %v1169 = vpack.c.b16 %v1043, %v1037
    %v1170 = vpack.c.b16 %v1044, %v1038
    %v1171 = vpack.c.b16 %v1045, %v1039
    %v1172 = vpack.c.b16 %v1046, %v1040
    %v1173 = vpack.c.b16 %v1053, %v1047
    %v1174 = vpack.c.b16 %v1054, %v1048
    %v1175 = vpack.c.b16 %v1055, %v1049
    %v1176 = vpack.c.b16 %v1056, %v1050
    %v1177 = vpack.c.b16 %v1057, %v1051
    %v1178 = vpack.c.b16 %v1058, %v1052
    %v1179 = vpack.c.b16 %v1065, %v1059
    %v1180 = vpack.c.b16 %v1066, %v1060
    %v1181 = vpack.c.b16 %v1067, %v1061
    %v1182 = vpack.c.b16 %v1068, %v1062
    %v1183 = vpack.c.b16 %v1069, %v1063
    %v1184 = vpack.c.b16 %v1070, %v1064
    %v1185 = vpack.c.b16 %v1077, %v1071
    %v1186 = vpack.c.b16 %v1078, %v1072
    %v1187 = vpack.c.b16 %v1079, %v1073
    %v1188 = vpack.c.b16 %v1080, %v1074
    %v1189 = vpack.c.b16 %v1081, %v1075
    %v1190 = vpack.c.b16 %v1082, %v1076
    %v1191 = vpack.c.b16 %v1089, %v1083
    %v1192 = vpack.c.b16 %v1090, %v1084
    %v1193 = vpack.c.b16 %v1091, %v1085
    %v1194 = vpack.c.b16 %v1092, %v1086
    %v1195 = vpack.c.b16 %v1093, %v1087
    %v1196 = vpack.c.b16 %v1094, %v1088
    %v1197 = vpack.c.b16 %v1101, %v1095
    %v1198 = vpack.c.b16 %v1102, %v1096
    %v1199 = vpack.c.b16 %v1103, %v1097
    %v1200 = vpack.c.b16 %v1104, %v1098
    %v1201 = vpack.c.b16 %v1105, %v1099
    %v1202 = vpack.c.b16 %v1106, %v1100
    %1299 = vmatprep.subr.bf16.mxu0 %v1108
    %1300 = vmatpush1.bf16.msra.mxu0 %v1107
    %1301 = vmatprep.subr.bf16.mxu0 %v1114
    %1302 = vmatpush1.bf16.msra.mxu0 %v1113
    %1303 = vmatprep.subr.bf16.mxu0 %v1120
    %1304 = vmatpush1.bf16.msra.mxu0 %v1119
    %1305 = vmatprep.subr.bf16.mxu0 %v1126
    %1306 = vmatpush1.bf16.msra.mxu0 %v1125
    %1307 = vmatprep.subr.bf16.mxu0 %v1132
    %1308 = vmatpush1.bf16.msra.mxu0 %v1131
    %1309 = vmatprep.subr.bf16.mxu0 %v1138
    %1310 = vmatpush1.bf16.msra.mxu0 %v1137
    %1311 = vmatprep.subr.bf16.mxu0 %v1144
    %1312 = vmatpush1.bf16.msra.mxu0 %v1143
    %1313 = vmatprep.subr.bf16.mxu0 %v1150
    %1314 = vmatpush1.bf16.msra.mxu0 %v1149
    %1315 = vmatprep.subr.bf16.mxu0 %v1156
    %1316 = vmatpush1.bf16.msra.mxu0 %v1155
    %1317 = vmatprep.subr.bf16.mxu0 %v1162
    %1318 = vmatpush1.bf16.msra.mxu0 %v1161
    %1319 = vmatprep.subr.bf16.mxu0 %v1168
    %1320 = vmatpush1.bf16.msra.mxu0 %v1167
    %1321 = vmatprep.subr.bf16.mxu0 %v1174
    %1322 = vmatpush1.bf16.msra.mxu0 %v1173
    %1323 = vmatprep.subr.bf16.mxu0 %v1180
    %1324 = vmatpush1.bf16.msra.mxu0 %v1179
    %1325 = vmatprep.subr.bf16.mxu0 %v1186
    %1326 = vmatpush1.bf16.msra.mxu0 %v1185
    %1327 = vmatprep.subr.bf16.mxu0 %v1192
    %1328 = vmatpush1.bf16.msra.mxu0 %v1191
    %1329 = vmatprep.subr.bf16.mxu0 %v1198
    %1330 = vmatpush1.bf16.msra.mxu0 %v1197
    %1331 = vmatprep.mubr.bf16.mxu0 0
    %1332 = vmatmul.mubr.bf16.gmra.mrb[0].mxu0 0
    %v1333 = vpop.f32.mrb[0].mxu0
    %v1334 = vadd.f32 %v783, %v1333
    %v1335 = vpop.f32.mrb[0].mxu0
    %v1336 = vadd.f32 %v787, %v1335
    %v1337 = vpop.f32.mrb[0].mxu0
    %v1338 = vpop.f32.mrb[0].mxu0
    %1339 = vdwg.mxu0
    %1340 = vmatprep.subr.bf16.mxu0 %v1110
    %1341 = vmatpush1.bf16.msra.mxu0 %v1109
    %1342 = vmatprep.subr.bf16.mxu0 %v1116
    %1343 = vmatpush1.bf16.msra.mxu0 %v1115
    %1344 = vmatprep.subr.bf16.mxu0 %v1122
    %1345 = vmatpush1.bf16.msra.mxu0 %v1121
    %1346 = vmatprep.subr.bf16.mxu0 %v1128
    %1347 = vmatpush1.bf16.msra.mxu0 %v1127
    %1348 = vmatprep.subr.bf16.mxu0 %v1134
    %1349 = vmatpush1.bf16.msra.mxu0 %v1133
    %1350 = vmatprep.subr.bf16.mxu0 %v1140
    %1351 = vmatpush1.bf16.msra.mxu0 %v1139
    %1352 = vmatprep.subr.bf16.mxu0 %v1146
    %1353 = vmatpush1.bf16.msra.mxu0 %v1145
    %1354 = vmatprep.subr.bf16.mxu0 %v1152
    %1355 = vmatpush1.bf16.msra.mxu0 %v1151
    %1356 = vmatprep.subr.bf16.mxu0 %v1158
    %1357 = vmatpush1.bf16.msra.mxu0 %v1157
    %1358 = vmatprep.subr.bf16.mxu0 %v1164
    %1359 = vmatpush1.bf16.msra.mxu0 %v1163
    %1360 = vmatprep.subr.bf16.mxu0 %v1170
    %1361 = vmatpush1.bf16.msra.mxu0 %v1169
    %1362 = vmatprep.subr.bf16.mxu0 %v1176
    %1363 = vmatpush1.bf16.msra.mxu0 %v1175
    %1364 = vmatprep.subr.bf16.mxu0 %v1182
    %1365 = vmatpush1.bf16.msra.mxu0 %v1181
    %1366 = vmatprep.subr.bf16.mxu0 %v1188
    %1367 = vmatpush1.bf16.msra.mxu0 %v1187
    %1368 = vmatprep.subr.bf16.mxu0 %v1194
    %1369 = vmatpush1.bf16.msra.mxu0 %v1193
    %1370 = vmatprep.subr.bf16.mxu0 %v1200
    %1371 = vmatpush1.bf16.msra.mxu0 %v1199
    %1372 = vmatprep.mubr.bf16.mxu0 0
    %1373 = vmatmul.mubr.bf16.gmra.mrb[0].mxu0 0
    %v1374 = vpop.f32.mrb[0].mxu0
    %v1375 = vadd.f32 %v791, %v1374
    %v1376 = vpop.f32.mrb[0].mxu0
    %v1377 = vadd.f32 %v795, %v1376
    %v1378 = vpop.f32.mrb[0].mxu0
    %v1379 = vpop.f32.mrb[0].mxu0
    %1380 = vdwg.mxu0
    %1381 = vmatprep.subr.bf16.mxu0 %v1112
    %1382 = vmatpush1.bf16.msra.mxu0 %v1111
    %1383 = vmatprep.subr.bf16.mxu0 %v1118
    %1384 = vmatpush1.bf16.msra.mxu0 %v1117
    %1385 = vmatprep.subr.bf16.mxu0 %v1124
    %1386 = vmatpush1.bf16.msra.mxu0 %v1123
    %1387 = vmatprep.subr.bf16.mxu0 %v1130
    %1388 = vmatpush1.bf16.msra.mxu0 %v1129
    %1389 = vmatprep.subr.bf16.mxu0 %v1136
    %1390 = vmatpush1.bf16.msra.mxu0 %v1135
    %1391 = vmatprep.subr.bf16.mxu0 %v1142
    %1392 = vmatpush1.bf16.msra.mxu0 %v1141
    %1393 = vmatprep.subr.bf16.mxu0 %v1148
    %1394 = vmatpush1.bf16.msra.mxu0 %v1147
    %1395 = vmatprep.subr.bf16.mxu0 %v1154
    %1396 = vmatpush1.bf16.msra.mxu0 %v1153
    %1397 = vmatprep.subr.bf16.mxu0 %v1160
    %1398 = vmatpush1.bf16.msra.mxu0 %v1159
    %1399 = vmatprep.subr.bf16.mxu0 %v1166
    %1400 = vmatpush1.bf16.msra.mxu0 %v1165
    %1401 = vmatprep.subr.bf16.mxu0 %v1172
    %1402 = vmatpush1.bf16.msra.mxu0 %v1171
    %1403 = vmatprep.subr.bf16.mxu0 %v1178
    %1404 = vmatpush1.bf16.msra.mxu0 %v1177
    %1405 = vmatprep.subr.bf16.mxu0 %v1184
    %1406 = vmatpush1.bf16.msra.mxu0 %v1183
    %1407 = vmatprep.subr.bf16.mxu0 %v1190
    %1408 = vmatpush1.bf16.msra.mxu0 %v1189
    %1409 = vmatprep.subr.bf16.mxu0 %v1196
    %1410 = vmatpush1.bf16.msra.mxu0 %v1195
    %1411 = vmatprep.subr.bf16.mxu0 %v1202
    %1412 = vmatpush1.bf16.msra.mxu0 %v1201
    %1413 = vmatprep.mubr.bf16.mxu0 0
    %1414 = vmatmul.mubr.bf16.gmra.mrb[0].mxu0 0
    %v1415 = vpop.f32.mrb[0].mxu0
    %v1416 = vadd.f32 %v799, %v1415
    %v1417 = vpop.f32.mrb[0].mxu0
    %v1418 = vadd.f32 %v803, %v1417
    %v1419 = vpop.f32.mrb[0].mxu0
    %v1420 = vpop.f32.mrb[0].mxu0
    %1421 = vdwg.mxu0
    %v1422 = vadd.f32 %v813, %v1334
    %v1423 = vadd.f32 %v814, %v1336
    %v1424 = vxor.u32 %v1422, 2147483648
    %v1425 = vxor.u32 %v1423, 2147483648
    %v1426 = vmul.f32 %v1424, 1.442695
    %v1427 = vpow.pop %v1426
    %v1428 = vmul.f32 %v1425, 1.442695
    %v1429 = vpow.pop %v1428
    %v1430 = vadd.f32 %v1427, 1.0
    %v1431 = vadd.f32 %v1429, 1.0
    %v1432 = vrcp.pop %v1430
    %v1433 = vmul.f32 1.0, %v1432
    %v1434 = vrcp.pop %v1431
    %v1435 = vmul.f32 1.0, %v1434
    %v1436 = vadd.f32 %v815, %v1375
    %v1437 = vadd.f32 %v816, %v1377
    %v1438 = vxor.u32 %v1436, 2147483648
    %v1439 = vxor.u32 %v1437, 2147483648
    %v1440 = vmul.f32 %v1438, 1.442695
    %v1441 = vpow.pop %v1440
    %v1442 = vmul.f32 %v1439, 1.442695
    %v1443 = vpow.pop %v1442
    %v1444 = vadd.f32 %v1441, 1.0
    %v1445 = vadd.f32 %v1443, 1.0
    %v1446 = vrcp.pop %v1444
    %v1447 = vmul.f32 1.0, %v1446
    %v1448 = vrcp.pop %v1445
    %v1449 = vmul.f32 1.0, %v1448
    %v1450 = vmul.f32 %v1433, %v1416
    %v1451 = vmul.f32 %v1435, %v1418
    %v1452 = vadd.f32 %v817, %v1450
    %v1453 = vadd.f32 %v818, %v1451
    %v1454 = vtanh.pop %v1452
    %v1455 = vtanh.pop %v1453
    %v1456 = vsub.f32 1.0, %v1447
    %v1457 = vsub.f32 1.0, %v1449
    %v1458 = vmul.f32 %v1456, %v1454
    %v1459 = vmul.f32 %v1457, %v1455
    %v1460 = vmul.f32 %v1447, 0.0
    %v1461 = vmul.f32 %v1449, 0.0
    %v1462 = vadd.f32 %v1458, %v1460
    %v1463 = vadd.f32 %v1459, %v1461
    %s1464 = smul.u32 1, 6
    %s1465 = smul.addr %s1464, 8
    %s1466 = scalar_lea.vmem [#allocation2], %s1465
    %v1467 = vld [vmem:[%s1466] sm:$0xff]
    %v1468 = vld [vmem:[%s1466 + $0x8] sm:$0xff]
    %v1469 = vld [vmem:[%s1466 + $0x10] sm:$0xff]
    %v1470 = vld [vmem:[%s1466 + $0x18] sm:$0xff]
    %v1471 = vld [vmem:[%s1466 + $0x20] sm:$0xff]
    %v1472 = vld [vmem:[%s1466 + $0x28] sm:$0xff]
    %v1473 = vpack.c.bf16 %v1462, %v1462
    %v1474 = vpack.c.bf16 %v1463, %v1463
    %1475 = vmatprep.subr.bf16.mxu0 %v1108
    %1476 = vmatpush1.bf16.msra.mxu0 %v1107
    %1477 = vmatprep.subr.bf16.mxu0 %v1114
    %1478 = vmatpush1.bf16.msra.mxu0 %v1113
    %1479 = vmatprep.subr.bf16.mxu0 %v1120
    %1480 = vmatpush1.bf16.msra.mxu0 %v1119
    %1481 = vmatprep.subr.bf16.mxu0 %v1126
    %1482 = vmatpush1.bf16.msra.mxu0 %v1125
    %1483 = vmatprep.subr.bf16.mxu0 %v1132
    %1484 = vmatpush1.bf16.msra.mxu0 %v1131
    %1485 = vmatprep.subr.bf16.mxu0 %v1138
    %1486 = vmatpush1.bf16.msra.mxu0 %v1137
    %1487 = vmatprep.subr.bf16.mxu0 %v1144
    %1488 = vmatpush1.bf16.msra.mxu0 %v1143
    %1489 = vmatprep.subr.bf16.mxu0 %v1150
    %1490 = vmatpush1.bf16.msra.mxu0 %v1149
    %1491 = vmatprep.subr.bf16.mxu0 %v1156
    %1492 = vmatpush1.bf16.msra.mxu0 %v1155
    %1493 = vmatprep.subr.bf16.mxu0 %v1162
    %1494 = vmatpush1.bf16.msra.mxu0 %v1161
    %1495 = vmatprep.subr.bf16.mxu0 %v1168
    %1496 = vmatpush1.bf16.msra.mxu0 %v1167
    %1497 = vmatprep.subr.bf16.mxu0 %v1174
    %1498 = vmatpush1.bf16.msra.mxu0 %v1173
    %1499 = vmatprep.subr.bf16.mxu0 %v1180
    %1500 = vmatpush1.bf16.msra.mxu0 %v1179
    %1501 = vmatprep.subr.bf16.mxu0 %v1186
    %1502 = vmatpush1.bf16.msra.mxu0 %v1185
    %1503 = vmatprep.subr.bf16.mxu0 %v1192
    %1504 = vmatpush1.bf16.msra.mxu0 %v1191
    %1505 = vmatprep.subr.bf16.mxu0 %v1198
    %1506 = vmatpush1.bf16.msra.mxu0 %v1197
    %1507 = vmatprep.mubr.bf16.mxu0 %v1474
    %1508 = vmatmul.mubr.bf16.gmra.mrb[0].mxu0 %v1473
    %v1509 = vpop.f32.mrb[0].mxu0
    %v1510 = vadd.f32 %v783, %v1509
    %v1511 = vpop.f32.mrb[0].mxu0
    %v1512 = vadd.f32 %v787, %v1511
    %v1513 = vpop.f32.mrb[0].mxu0
    %v1514 = vpop.f32.mrb[0].mxu0
    %1515 = vdwg.mxu0
    %1516 = vmatprep.subr.bf16.mxu0 %v1110
    %1517 = vmatpush1.bf16.msra.mxu0 %v1109
    %1518 = vmatprep.subr.bf16.mxu0 %v1116
    %1519 = vmatpush1.bf16.msra.mxu0 %v1115
    %1520 = vmatprep.subr.bf16.mxu0 %v1122
    %1521 = vmatpush1.bf16.msra.mxu0 %v1121
    %1522 = vmatprep.subr.bf16.mxu0 %v1128
    %1523 = vmatpush1.bf16.msra.mxu0 %v1127
    %1524 = vmatprep.subr.bf16.mxu0 %v1134
    %1525 = vmatpush1.bf16.msra.mxu0 %v1133
    %1526 = vmatprep.subr.bf16.mxu0 %v1140
    %1527 = vmatpush1.bf16.msra.mxu0 %v1139
    %1528 = vmatprep.subr.bf16.mxu0 %v1146
    %1529 = vmatpush1.bf16.msra.mxu0 %v1145
    %1530 = vmatprep.subr.bf16.mxu0 %v1152
    %1531 = vmatpush1.bf16.msra.mxu0 %v1151
    %1532 = vmatprep.subr.bf16.mxu0 %v1158
    %1533 = vmatpush1.bf16.msra.mxu0 %v1157
    %1534 = vmatprep.subr.bf16.mxu0 %v1164
    %1535 = vmatpush1.bf16.msra.mxu0 %v1163
    %1536 = vmatprep.subr.bf16.mxu0 %v1170
    %1537 = vmatpush1.bf16.msra.mxu0 %v1169
    %1538 = vmatprep.subr.bf16.mxu0 %v1176
    %1539 = vmatpush1.bf16.msra.mxu0 %v1175
    %1540 = vmatprep.subr.bf16.mxu0 %v1182
    %1541 = vmatpush1.bf16.msra.mxu0 %v1181
    %1542 = vmatprep.subr.bf16.mxu0 %v1188
    %1543 = vmatpush1.bf16.msra.mxu0 %v1187
    %1544 = vmatprep.subr.bf16.mxu0 %v1194
    %1545 = vmatpush1.bf16.msra.mxu0 %v1193
    %1546 = vmatprep.subr.bf16.mxu0 %v1200
    %1547 = vmatpush1.bf16.msra.mxu0 %v1199
    %1548 = vmatprep.mubr.bf16.mxu0 %v1474
    %1549 = vmatmul.mubr.bf16.gmra.mrb[0].mxu0 %v1473
    %v1550 = vpop.f32.mrb[0].mxu0
    %v1551 = vadd.f32 %v791, %v1550
    %v1552 = vpop.f32.mrb[0].mxu0
    %v1553 = vadd.f32 %v795, %v1552
    %v1554 = vpop.f32.mrb[0].mxu0
    %v1555 = vpop.f32.mrb[0].mxu0
    %1556 = vdwg.mxu0
    %1557 = vmatprep.subr.bf16.mxu0 %v1112
    %1558 = vmatpush1.bf16.msra.mxu0 %v1111
    %1559 = vmatprep.subr.bf16.mxu0 %v1118
    %1560 = vmatpush1.bf16.msra.mxu0 %v1117
    %1561 = vmatprep.subr.bf16.mxu0 %v1124
    %1562 = vmatpush1.bf16.msra.mxu0 %v1123
    %1563 = vmatprep.subr.bf16.mxu0 %v1130
    %1564 = vmatpush1.bf16.msra.mxu0 %v1129
    %1565 = vmatprep.subr.bf16.mxu0 %v1136
    %1566 = vmatpush1.bf16.msra.mxu0 %v1135
    %1567 = vmatprep.subr.bf16.mxu0 %v1142
    %1568 = vmatpush1.bf16.msra.mxu0 %v1141
    %1569 = vmatprep.subr.bf16.mxu0 %v1148
    %1570 = vmatpush1.bf16.msra.mxu0 %v1147
    %1571 = vmatprep.subr.bf16.mxu0 %v1154
    %1572 = vmatpush1.bf16.msra.mxu0 %v1153
    %1573 = vmatprep.subr.bf16.mxu0 %v1160
    %1574 = vmatpush1.bf16.msra.mxu0 %v1159
    %1575 = vmatprep.subr.bf16.mxu0 %v1166
    %1576 = vmatpush1.bf16.msra.mxu0 %v1165
    %1577 = vmatprep.subr.bf16.mxu0 %v1172
    %1578 = vmatpush1.bf16.msra.mxu0 %v1171
    %1579 = vmatprep.subr.bf16.mxu0 %v1178
    %1580 = vmatpush1.bf16.msra.mxu0 %v1177
    %1581 = vmatprep.subr.bf16.mxu0 %v1184
    %1582 = vmatpush1.bf16.msra.mxu0 %v1183
    %1583 = vmatprep.subr.bf16.mxu0 %v1190
    %1584 = vmatpush1.bf16.msra.mxu0 %v1189
    %1585 = vmatprep.subr.bf16.mxu0 %v1196
    %1586 = vmatpush1.bf16.msra.mxu0 %v1195
    %1587 = vmatprep.subr.bf16.mxu0 %v1202
    %1588 = vmatpush1.bf16.msra.mxu0 %v1201
    %1589 = vmatprep.mubr.bf16.mxu0 %v1474
    %1590 = vmatmul.mubr.bf16.gmra.mrb[0].mxu0 %v1473
    %v1591 = vpop.f32.mrb[0].mxu0
    %v1592 = vadd.f32 %v799, %v1591
    %v1593 = vpop.f32.mrb[0].mxu0
    %v1594 = vadd.f32 %v803, %v1593
    %v1595 = vpop.f32.mrb[0].mxu0
    %v1596 = vpop.f32.mrb[0].mxu0
    %1597 = vdwg.mxu0
    %v1598 = vadd.f32 %v1467, %v1510
    %v1599 = vadd.f32 %v1468, %v1512
    %v1600 = vxor.u32 %v1598, 2147483648
    %v1601 = vxor.u32 %v1599, 2147483648
    %v1602 = vmul.f32 %v1600, 1.442695
    %v1603 = vpow.pop %v1602
    %v1604 = vmul.f32 %v1601, 1.442695
    %v1605 = vpow.pop %v1604
    %v1606 = vadd.f32 %v1603, 1.0
    %v1607 = vadd.f32 %v1605, 1.0
    %v1608 = vrcp.pop %v1606
    %v1609 = vmul.f32 1.0, %v1608
    %v1610 = vrcp.pop %v1607
    %v1611 = vmul.f32 1.0, %v1610
    %v1612 = vadd.f32 %v1469, %v1551
    %v1613 = vadd.f32 %v1470, %v1553
    %v1614 = vxor.u32 %v1612, 2147483648
    %v1615 = vxor.u32 %v1613, 2147483648
    %v1616 = vmul.f32 %v1614, 1.442695
    %v1617 = vpow.pop %v1616
    %v1618 = vmul.f32 %v1615, 1.442695
    %v1619 = vpow.pop %v1618
    %v1620 = vadd.f32 %v1617, 1.0
    %v1621 = vadd.f32 %v1619, 1.0
    %v1622 = vrcp.pop %v1620
    %v1623 = vmul.f32 1.0, %v1622
    %v1624 = vrcp.pop %v1621
    %v1625 = vmul.f32 1.0, %v1624
    %v1626 = vmul.f32 %v1609, %v1592
    %v1627 = vmul.f32 %v1611, %v1594
    %v1628 = vadd.f32 %v1471, %v1626
    %v1629 = vadd.f32 %v1472, %v1627
    %v1630 = vtanh.pop %v1628
    %v1631 = vtanh.pop %v1629
    %v1632 = vsub.f32 1.0, %v1623
    %v1633 = vsub.f32 1.0, %v1625
    %v1634 = vmul.f32 %v1632, %v1630
    %v1635 = vmul.f32 %v1633, %v1631
    %v1636 = vmul.f32 %v1623, %v1462
    %v1637 = vmul.f32 %v1625, %v1463
    %v1638 = vadd.f32 %v1634, %v1636
    %v1639 = vadd.f32 %v1635, %v1637
    %s1640 = smul.u32 2, 6
    %s1641 = smul.addr %s1640, 8
    %s1642 = scalar_lea.vmem [#allocation2], %s1641
    %v1643 = vld [vmem:[%s1642] sm:$0xff]
    %v1644 = vld [vmem:[%s1642 + $0x8] sm:$0xff]
    %v1645 = vld [vmem:[%s1642 + $0x10] sm:$0xff]
    %v1646 = vld [vmem:[%s1642 + $0x18] sm:$0xff]
    %v1647 = vld [vmem:[%s1642 + $0x20] sm:$0xff]
    %v1648 = vld [vmem:[%s1642 + $0x28] sm:$0xff]
    %v1649 = vpack.c.bf16 %v1638, %v1638
    %v1650 = vpack.c.bf16 %v1639, %v1639
    %1651 = vmatprep.subr.bf16.mxu0 %v1108
    %1652 = vmatpush1.bf16.msra.mxu0 %v1107
    %1653 = vmatprep.subr.bf16.mxu0 %v1114
    %1654 = vmatpush1.bf16.msra.mxu0 %v1113
    %1655 = vmatprep.subr.bf16.mxu0 %v1120
    %1656 = vmatpush1.bf16.msra.mxu0 %v1119
    %1657 = vmatprep.subr.bf16.mxu0 %v1126
    %1658 = vmatpush1.bf16.msra.mxu0 %v1125
    %1659 = vmatprep.subr.bf16.mxu0 %v1132
    %1660 = vmatpush1.bf16.msra.mxu0 %v1131
    %1661 = vmatprep.subr.bf16.mxu0 %v1138
    %1662 = vmatpush1.bf16.msra.mxu0 %v1137
    %1663 = vmatprep.subr.bf16.mxu0 %v1144
    %1664 = vmatpush1.bf16.msra.mxu0 %v1143
    %1665 = vmatprep.subr.bf16.mxu0 %v1150
    %1666 = vmatpush1.bf16.msra.mxu0 %v1149
    %1667 = vmatprep.subr.bf16.mxu0 %v1156
    %1668 = vmatpush1.bf16.msra.mxu0 %v1155
    %1669 = vmatprep.subr.bf16.mxu0 %v1162
    %1670 = vmatpush1.bf16.msra.mxu0 %v1161
    %1671 = vmatprep.subr.bf16.mxu0 %v1168
    %1672 = vmatpush1.bf16.msra.mxu0 %v1167
    %1673 = vmatprep.subr.bf16.mxu0 %v1174
    %1674 = vmatpush1.bf16.msra.mxu0 %v1173
    %1675 = vmatprep.subr.bf16.mxu0 %v1180
    %1676 = vmatpush1.bf16.msra.mxu0 %v1179
    %1677 = vmatprep.subr.bf16.mxu0 %v1186
    %1678 = vmatpush1.bf16.msra.mxu0 %v1185
    %1679 = vmatprep.subr.bf16.mxu0 %v1192
    %1680 = vmatpush1.bf16.msra.mxu0 %v1191
    %1681 = vmatprep.subr.bf16.mxu0 %v1198
    %1682 = vmatpush1.bf16.msra.mxu0 %v1197
    %1683 = vmatprep.mubr.bf16.mxu0 %v1650
    %1684 = vmatmul.mubr.bf16.gmra.mrb[0].mxu0 %v1649
    %v1685 = vpop.f32.mrb[0].mxu0
    %v1686 = vadd.f32 %v783, %v1685
    %v1687 = vpop.f32.mrb[0].mxu0
    %v1688 = vadd.f32 %v787, %v1687
    %v1689 = vpop.f32.mrb[0].mxu0
    %v1690 = vpop.f32.mrb[0].mxu0
    %1691 = vdwg.mxu0
    %1692 = vmatprep.subr.bf16.mxu0 %v1110
    %1693 = vmatpush1.bf16.msra.mxu0 %v1109
    %1694 = vmatprep.subr.bf16.mxu0 %v1116
    %1695 = vmatpush1.bf16.msra.mxu0 %v1115
    %1696 = vmatprep.subr.bf16.mxu0 %v1122
    %1697 = vmatpush1.bf16.msra.mxu0 %v1121
    %1698 = vmatprep.subr.bf16.mxu0 %v1128
    %1699 = vmatpush1.bf16.msra.mxu0 %v1127
    %1700 = vmatprep.subr.bf16.mxu0 %v1134
    %1701 = vmatpush1.bf16.msra.mxu0 %v1133
    %1702 = vmatprep.subr.bf16.mxu0 %v1140
    %1703 = vmatpush1.bf16.msra.mxu0 %v1139
    %1704 = vmatprep.subr.bf16.mxu0 %v1146
    %1705 = vmatpush1.bf16.msra.mxu0 %v1145
    %1706 = vmatprep.subr.bf16.mxu0 %v1152
    %1707 = vmatpush1.bf16.msra.mxu0 %v1151
    %1708 = vmatprep.subr.bf16.mxu0 %v1158
    %1709 = vmatpush1.bf16.msra.mxu0 %v1157
    %1710 = vmatprep.subr.bf16.mxu0 %v1164
    %1711 = vmatpush1.bf16.msra.mxu0 %v1163
    %1712 = vmatprep.subr.bf16.mxu0 %v1170
    %1713 = vmatpush1.bf16.msra.mxu0 %v1169
    %1714 = vmatprep.subr.bf16.mxu0 %v1176
    %1715 = vmatpush1.bf16.msra.mxu0 %v1175
    %1716 = vmatprep.subr.bf16.mxu0 %v1182
    %1717 = vmatpush1.bf16.msra.mxu0 %v1181
    %1718 = vmatprep.subr.bf16.mxu0 %v1188
    %1719 = vmatpush1.bf16.msra.mxu0 %v1187
    %1720 = vmatprep.subr.bf16.mxu0 %v1194
    %1721 = vmatpush1.bf16.msra.mxu0 %v1193
    %1722 = vmatprep.subr.bf16.mxu0 %v1200
    %1723 = vmatpush1.bf16.msra.mxu0 %v1199
    %1724 = vmatprep.mubr.bf16.mxu0 %v1650
    %1725 = vmatmul.mubr.bf16.gmra.mrb[0].mxu0 %v1649
    %v1726 = vpop.f32.mrb[0].mxu0
    %v1727 = vadd.f32 %v791, %v1726
    %v1728 = vpop.f32.mrb[0].mxu0
    %v1729 = vadd.f32 %v795, %v1728
    %v1730 = vpop.f32.mrb[0].mxu0
    %v1731 = vpop.f32.mrb[0].mxu0
    %1732 = vdwg.mxu0
    %1733 = vmatprep.subr.bf16.mxu0 %v1112
    %1734 = vmatpush1.bf16.msra.mxu0 %v1111
    %1735 = vmatprep.subr.bf16.mxu0 %v1118
    %1736 = vmatpush1.bf16.msra.mxu0 %v1117
    %1737 = vmatprep.subr.bf16.mxu0 %v1124
    %1738 = vmatpush1.bf16.msra.mxu0 %v1123
    %1739 = vmatprep.subr.bf16.mxu0 %v1130
    %1740 = vmatpush1.bf16.msra.mxu0 %v1129
    %1741 = vmatprep.subr.bf16.mxu0 %v1136
    %1742 = vmatpush1.bf16.msra.mxu0 %v1135
    %1743 = vmatprep.subr.bf16.mxu0 %v1142
    %1744 = vmatpush1.bf16.msra.mxu0 %v1141
    %1745 = vmatprep.subr.bf16.mxu0 %v1148
    %1746 = vmatpush1.bf16.msra.mxu0 %v1147
    %1747 = vmatprep.subr.bf16.mxu0 %v1154
    %1748 = vmatpush1.bf16.msra.mxu0 %v1153
    %1749 = vmatprep.subr.bf16.mxu0 %v1160
    %1750 = vmatpush1.bf16.msra.mxu0 %v1159
    %1751 = vmatprep.subr.bf16.mxu0 %v1166
    %1752 = vmatpush1.bf16.msra.mxu0 %v1165
    %1753 = vmatprep.subr.bf16.mxu0 %v1172
    %1754 = vmatpush1.bf16.msra.mxu0 %v1171
    %1755 = vmatprep.subr.bf16.mxu0 %v1178
    %1756 = vmatpush1.bf16.msra.mxu0 %v1177
    %1757 = vmatprep.subr.bf16.mxu0 %v1184
    %1758 = vmatpush1.bf16.msra.mxu0 %v1183
    %1759 = vmatprep.subr.bf16.mxu0 %v1190
    %1760 = vmatpush1.bf16.msra.mxu0 %v1189
    %1761 = vmatprep.subr.bf16.mxu0 %v1196
    %1762 = vmatpush1.bf16.msra.mxu0 %v1195
    %1763 = vmatprep.subr.bf16.mxu0 %v1202
    %1764 = vmatpush1.bf16.msra.mxu0 %v1201
    %1765 = vmatprep.mubr.bf16.mxu0 %v1650
    %1766 = vmatmul.mubr.bf16.gmra.mrb[0].mxu0 %v1649
    %v1767 = vpop.f32.mrb[0].mxu0
    %v1768 = vadd.f32 %v799, %v1767
    %v1769 = vpop.f32.mrb[0].mxu0
    %v1770 = vadd.f32 %v803, %v1769
    %v1771 = vpop.f32.mrb[0].mxu0
    %v1772 = vpop.f32.mrb[0].mxu0
    %1773 = vdwg.mxu0
    %v1774 = vadd.f32 %v1643, %v1686
    %v1775 = vadd.f32 %v1644, %v1688
    %v1776 = vxor.u32 %v1774, 2147483648
    %v1777 = vxor.u32 %v1775, 2147483648
    %v1778 = vmul.f32 %v1776, 1.442695
    %v1779 = vpow.pop %v1778
    %v1780 = vmul.f32 %v1777, 1.442695
    %v1781 = vpow.pop %v1780
    %v1782 = vadd.f32 %v1779, 1.0
    %v1783 = vadd.f32 %v1781, 1.0
    %v1784 = vrcp.pop %v1782
    %v1785 = vmul.f32 1.0, %v1784
    %v1786 = vrcp.pop %v1783
    %v1787 = vmul.f32 1.0, %v1786
    %v1788 = vadd.f32 %v1645, %v1727
    %v1789 = vadd.f32 %v1646, %v1729
    %v1790 = vxor.u32 %v1788, 2147483648
    %v1791 = vxor.u32 %v1789, 2147483648
    %v1792 = vmul.f32 %v1790, 1.442695
    %v1793 = vpow.pop %v1792
    %v1794 = vmul.f32 %v1791, 1.442695
    %v1795 = vpow.pop %v1794
    %v1796 = vadd.f32 %v1793, 1.0
    %v1797 = vadd.f32 %v1795, 1.0
    %v1798 = vrcp.pop %v1796
    %v1799 = vmul.f32 1.0, %v1798
    %v1800 = vrcp.pop %v1797
    %v1801 = vmul.f32 1.0, %v1800
    %v1802 = vmul.f32 %v1785, %v1768
    %v1803 = vmul.f32 %v1787, %v1770
    %v1804 = vadd.f32 %v1647, %v1802
    %v1805 = vadd.f32 %v1648, %v1803
    %v1806 = vtanh.pop %v1804
    %v1807 = vtanh.pop %v1805
    %v1808 = vsub.f32 1.0, %v1799
    %v1809 = vsub.f32 1.0, %v1801
    %v1810 = vmul.f32 %v1808, %v1806
    %v1811 = vmul.f32 %v1809, %v1807
    %v1812 = vmul.f32 %v1799, %v1638
    %v1813 = vmul.f32 %v1801, %v1639
    %v1814 = vadd.f32 %v1810, %v1812
    %v1815 = vadd.f32 %v1811, %v1813
    %s1816 = smul.u32 3, 6
    %s1817 = smul.addr %s1816, 8
    %s1818 = scalar_lea.vmem [#allocation2], %s1817
    %v1819 = vld [vmem:[%s1818] sm:$0xff]
    %v1820 = vld [vmem:[%s1818 + $0x8] sm:$0xff]
    %v1821 = vld [vmem:[%s1818 + $0x10] sm:$0xff]
    %v1822 = vld [vmem:[%s1818 + $0x18] sm:$0xff]
    %v1823 = vld [vmem:[%s1818 + $0x20] sm:$0xff]
    %v1824 = vld [vmem:[%s1818 + $0x28] sm:$0xff]
    %v1825 = vpack.c.bf16 %v1814, %v1814
    %v1826 = vpack.c.bf16 %v1815, %v1815
    %1827 = vmatprep.subr.bf16.mxu0 %v1108
    %1828 = vmatpush1.bf16.msra.mxu0 %v1107
    %1829 = vmatprep.subr.bf16.mxu0 %v1114
    %1830 = vmatpush1.bf16.msra.mxu0 %v1113
    %1831 = vmatprep.subr.bf16.mxu0 %v1120
    %1832 = vmatpush1.bf16.msra.mxu0 %v1119
    %1833 = vmatprep.subr.bf16.mxu0 %v1126
    %1834 = vmatpush1.bf16.msra.mxu0 %v1125
    %1835 = vmatprep.subr.bf16.mxu0 %v1132
    %1836 = vmatpush1.bf16.msra.mxu0 %v1131
    %1837 = vmatprep.subr.bf16.mxu0 %v1138
    %1838 = vmatpush1.bf16.msra.mxu0 %v1137
    %1839 = vmatprep.subr.bf16.mxu0 %v1144
    %1840 = vmatpush1.bf16.msra.mxu0 %v1143
    %1841 = vmatprep.subr.bf16.mxu0 %v1150
    %1842 = vmatpush1.bf16.msra.mxu0 %v1149
    %1843 = vmatprep.subr.bf16.mxu0 %v1156
    %1844 = vmatpush1.bf16.msra.mxu0 %v1155
    %1845 = vmatprep.subr.bf16.mxu0 %v1162
    %1846 = vmatpush1.bf16.msra.mxu0 %v1161
    %1847 = vmatprep.subr.bf16.mxu0 %v1168
    %1848 = vmatpush1.bf16.msra.mxu0 %v1167
    %1849 = vmatprep.subr.bf16.mxu0 %v1174
    %1850 = vmatpush1.bf16.msra.mxu0 %v1173
    %1851 = vmatprep.subr.bf16.mxu0 %v1180
    %1852 = vmatpush1.bf16.msra.mxu0 %v1179
    %1853 = vmatprep.subr.bf16.mxu0 %v1186
    %1854 = vmatpush1.bf16.msra.mxu0 %v1185
    %1855 = vmatprep.subr.bf16.mxu0 %v1192
    %1856 = vmatpush1.bf16.msra.mxu0 %v1191
    %1857 = vmatprep.subr.bf16.mxu0 %v1198
    %1858 = vmatpush1.bf16.msra.mxu0 %v1197
    %1859 = vmatprep.mubr.bf16.mxu0 %v1826
    %1860 = vmatmul.mubr.bf16.gmra.mrb[0].mxu0 %v1825
    %v1861 = vpop.f32.mrb[0].mxu0
    %v1862 = vadd.f32 %v783, %v1861
    %v1863 = vpop.f32.mrb[0].mxu0
    %v1864 = vadd.f32 %v787, %v1863
    %v1865 = vpop.f32.mrb[0].mxu0
    %v1866 = vpop.f32.mrb[0].mxu0
    %1867 = vdwg.mxu0
    %1868 = vmatprep.subr.bf16.mxu0 %v1110
    %1869 = vmatpush1.bf16.msra.mxu0 %v1109
    %1870 = vmatprep.subr.bf16.mxu0 %v1116
    %1871 = vmatpush1.bf16.msra.mxu0 %v1115
    %1872 = vmatprep.subr.bf16.mxu0 %v1122
    %1873 = vmatpush1.bf16.msra.mxu0 %v1121
    %1874 = vmatprep.subr.bf16.mxu0 %v1128
    %1875 = vmatpush1.bf16.msra.mxu0 %v1127
    %1876 = vmatprep.subr.bf16.mxu0 %v1134
    %1877 = vmatpush1.bf16.msra.mxu0 %v1133
    %1878 = vmatprep.subr.bf16.mxu0 %v1140
    %1879 = vmatpush1.bf16.msra.mxu0 %v1139
    %1880 = vmatprep.subr.bf16.mxu0 %v1146
    %1881 = vmatpush1.bf16.msra.mxu0 %v1145
    %1882 = vmatprep.subr.bf16.mxu0 %v1152
    %1883 = vmatpush1.bf16.msra.mxu0 %v1151
    %1884 = vmatprep.subr.bf16.mxu0 %v1158
    %1885 = vmatpush1.bf16.msra.mxu0 %v1157
    %1886 = vmatprep.subr.bf16.mxu0 %v1164
    %1887 = vmatpush1.bf16.msra.mxu0 %v1163
    %1888 = vmatprep.subr.bf16.mxu0 %v1170
    %1889 = vmatpush1.bf16.msra.mxu0 %v1169
    %1890 = vmatprep.subr.bf16.mxu0 %v1176
    %1891 = vmatpush1.bf16.msra.mxu0 %v1175
    %1892 = vmatprep.subr.bf16.mxu0 %v1182
    %1893 = vmatpush1.bf16.msra.mxu0 %v1181
    %1894 = vmatprep.subr.bf16.mxu0 %v1188
    %1895 = vmatpush1.bf16.msra.mxu0 %v1187
    %1896 = vmatprep.subr.bf16.mxu0 %v1194
    %1897 = vmatpush1.bf16.msra.mxu0 %v1193
    %1898 = vmatprep.subr.bf16.mxu0 %v1200
    %1899 = vmatpush1.bf16.msra.mxu0 %v1199
    %1900 = vmatprep.mubr.bf16.mxu0 %v1826
    %1901 = vmatmul.mubr.bf16.gmra.mrb[0].mxu0 %v1825
    %v1902 = vpop.f32.mrb[0].mxu0
    %v1903 = vadd.f32 %v791, %v1902
    %v1904 = vpop.f32.mrb[0].mxu0
    %v1905 = vadd.f32 %v795, %v1904
    %v1906 = vpop.f32.mrb[0].mxu0
    %v1907 = vpop.f32.mrb[0].mxu0
    %1908 = vdwg.mxu0
    %1909 = vmatprep.subr.bf16.mxu0 %v1112
    %1910 = vmatpush1.bf16.msra.mxu0 %v1111
    %1911 = vmatprep.subr.bf16.mxu0 %v1118
    %1912 = vmatpush1.bf16.msra.mxu0 %v1117
    %1913 = vmatprep.subr.bf16.mxu0 %v1124
    %1914 = vmatpush1.bf16.msra.mxu0 %v1123
    %1915 = vmatprep.subr.bf16.mxu0 %v1130
    %1916 = vmatpush1.bf16.msra.mxu0 %v1129
    %1917 = vmatprep.subr.bf16.mxu0 %v1136
    %1918 = vmatpush1.bf16.msra.mxu0 %v1135
    %1919 = vmatprep.subr.bf16.mxu0 %v1142
    %1920 = vmatpush1.bf16.msra.mxu0 %v1141
    %1921 = vmatprep.subr.bf16.mxu0 %v1148
    %1922 = vmatpush1.bf16.msra.mxu0 %v1147
    %1923 = vmatprep.subr.bf16.mxu0 %v1154
    %1924 = vmatpush1.bf16.msra.mxu0 %v1153
    %1925 = vmatprep.subr.bf16.mxu0 %v1160
    %1926 = vmatpush1.bf16.msra.mxu0 %v1159
    %1927 = vmatprep.subr.bf16.mxu0 %v1166
    %1928 = vmatpush1.bf16.msra.mxu0 %v1165
    %1929 = vmatprep.subr.bf16.mxu0 %v1172
    %1930 = vmatpush1.bf16.msra.mxu0 %v1171
    %1931 = vmatprep.subr.bf16.mxu0 %v1178
    %1932 = vmatpush1.bf16.msra.mxu0 %v1177
    %1933 = vmatprep.subr.bf16.mxu0 %v1184
    %1934 = vmatpush1.bf16.msra.mxu0 %v1183
    %1935 = vmatprep.subr.bf16.mxu0 %v1190
    %1936 = vmatpush1.bf16.msra.mxu0 %v1189
    %1937 = vmatprep.subr.bf16.mxu0 %v1196
    %1938 = vmatpush1.bf16.msra.mxu0 %v1195
    %1939 = vmatprep.subr.bf16.mxu0 %v1202
    %1940 = vmatpush1.bf16.msra.mxu0 %v1201
    %1941 = vmatprep.mubr.bf16.mxu0 %v1826
    %1942 = vmatmul.mubr.bf16.gmra.mrb[0].mxu0 %v1825
    %v1943 = vpop.f32.mrb[0].mxu0
    %v1944 = vadd.f32 %v799, %v1943
    %v1945 = vpop.f32.mrb[0].mxu0
    %v1946 = vadd.f32 %v803, %v1945
    %v1947 = vpop.f32.mrb[0].mxu0
    %v1948 = vpop.f32.mrb[0].mxu0
    %1949 = vdwg.mxu0
    %v1950 = vadd.f32 %v1819, %v1862
    %v1951 = vadd.f32 %v1820, %v1864
    %v1952 = vxor.u32 %v1950, 2147483648
    %v1953 = vxor.u32 %v1951, 2147483648
    %v1954 = vmul.f32 %v1952, 1.442695
    %v1955 = vpow.pop %v1954
    %v1956 = vmul.f32 %v1953, 1.442695
    %v1957 = vpow.pop %v1956
    %v1958 = vadd.f32 %v1955, 1.0
    %v1959 = vadd.f32 %v1957, 1.0
    %v1960 = vrcp.pop %v1958
    %v1961 = vmul.f32 1.0, %v1960
    %v1962 = vrcp.pop %v1959
    %v1963 = vmul.f32 1.0, %v1962
    %v1964 = vadd.f32 %v1821, %v1903
    %v1965 = vadd.f32 %v1822, %v1905
    %v1966 = vxor.u32 %v1964, 2147483648
    %v1967 = vxor.u32 %v1965, 2147483648
    %v1968 = vmul.f32 %v1966, 1.442695
    %v1969 = vpow.pop %v1968
    %v1970 = vmul.f32 %v1967, 1.442695
    %v1971 = vpow.pop %v1970
    %v1972 = vadd.f32 %v1969, 1.0
    %v1973 = vadd.f32 %v1971, 1.0
    %v1974 = vrcp.pop %v1972
    %v1975 = vmul.f32 1.0, %v1974
    %v1976 = vrcp.pop %v1973
    %v1977 = vmul.f32 1.0, %v1976
    %v1978 = vmul.f32 %v1961, %v1944
    %v1979 = vmul.f32 %v1963, %v1946
    %v1980 = vadd.f32 %v1823, %v1978
    %v1981 = vadd.f32 %v1824, %v1979
    %v1982 = vtanh.pop %v1980
    %v1983 = vtanh.pop %v1981
    %v1984 = vsub.f32 1.0, %v1975
    %v1985 = vsub.f32 1.0, %v1977
    %v1986 = vmul.f32 %v1984, %v1982
    %v1987 = vmul.f32 %v1985, %v1983
    %v1988 = vmul.f32 %v1975, %v1814
    %v1989 = vmul.f32 %v1977, %v1815
    %v1990 = vadd.f32 %v1986, %v1988
    %v1991 = vadd.f32 %v1987, %v1989
    %s1992 = smul.u32 4, 6
    %s1993 = smul.addr %s1992, 8
    %s1994 = scalar_lea.vmem [#allocation2], %s1993
    %v1995 = vld [vmem:[%s1994] sm:$0xff]
    %v1996 = vld [vmem:[%s1994 + $0x8] sm:$0xff]
    %v1997 = vld [vmem:[%s1994 + $0x10] sm:$0xff]
    %v1998 = vld [vmem:[%s1994 + $0x18] sm:$0xff]
    %v1999 = vld [vmem:[%s1994 + $0x20] sm:$0xff]
    %v2000 = vld [vmem:[%s1994 + $0x28] sm:$0xff]
    %v2001 = vpack.c.bf16 %v1990, %v1990
    %v2002 = vpack.c.bf16 %v1991, %v1991
    %2003 = vmatprep.subr.bf16.mxu0 %v1108
    %2004 = vmatpush1.bf16.msra.mxu0 %v1107
    %2005 = vmatprep.subr.bf16.mxu0 %v1114
    %2006 = vmatpush1.bf16.msra.mxu0 %v1113
    %2007 = vmatprep.subr.bf16.mxu0 %v1120
    %2008 = vmatpush1.bf16.msra.mxu0 %v1119
    %2009 = vmatprep.subr.bf16.mxu0 %v1126
    %2010 = vmatpush1.bf16.msra.mxu0 %v1125
    %2011 = vmatprep.subr.bf16.mxu0 %v1132
    %2012 = vmatpush1.bf16.msra.mxu0 %v1131
    %2013 = vmatprep.subr.bf16.mxu0 %v1138
    %2014 = vmatpush1.bf16.msra.mxu0 %v1137
    %2015 = vmatprep.subr.bf16.mxu0 %v1144
    %2016 = vmatpush1.bf16.msra.mxu0 %v1143
    %2017 = vmatprep.subr.bf16.mxu0 %v1150
    %2018 = vmatpush1.bf16.msra.mxu0 %v1149
    %2019 = vmatprep.subr.bf16.mxu0 %v1156
    %2020 = vmatpush1.bf16.msra.mxu0 %v1155
    %2021 = vmatprep.subr.bf16.mxu0 %v1162
    %2022 = vmatpush1.bf16.msra.mxu0 %v1161
    %2023 = vmatprep.subr.bf16.mxu0 %v1168
    %2024 = vmatpush1.bf16.msra.mxu0 %v1167
    %2025 = vmatprep.subr.bf16.mxu0 %v1174
    %2026 = vmatpush1.bf16.msra.mxu0 %v1173
    %2027 = vmatprep.subr.bf16.mxu0 %v1180
    %2028 = vmatpush1.bf16.msra.mxu0 %v1179
    %2029 = vmatprep.subr.bf16.mxu0 %v1186
    %2030 = vmatpush1.bf16.msra.mxu0 %v1185
    %2031 = vmatprep.subr.bf16.mxu0 %v1192
    %2032 = vmatpush1.bf16.msra.mxu0 %v1191
    %2033 = vmatprep.subr.bf16.mxu0 %v1198
    %2034 = vmatpush1.bf16.msra.mxu0 %v1197
    %2035 = vmatprep.mubr.bf16.mxu0 %v2002
    %2036 = vmatmul.mubr.bf16.gmra.mrb[0].mxu0 %v2001
    %v2037 = vpop.f32.mrb[0].mxu0
    %v2038 = vadd.f32 %v783, %v2037
    %v2039 = vpop.f32.mrb[0].mxu0
    %v2040 = vadd.f32 %v787, %v2039
    %v2041 = vpop.f32.mrb[0].mxu0
    %v2042 = vpop.f32.mrb[0].mxu0
    %2043 = vdwg.mxu0
    %2044 = vmatprep.subr.bf16.mxu0 %v1110
    %2045 = vmatpush1.bf16.msra.mxu0 %v1109
    %2046 = vmatprep.subr.bf16.mxu0 %v1116
    %2047 = vmatpush1.bf16.msra.mxu0 %v1115
    %2048 = vmatprep.subr.bf16.mxu0 %v1122
    %2049 = vmatpush1.bf16.msra.mxu0 %v1121
    %2050 = vmatprep.subr.bf16.mxu0 %v1128
    %2051 = vmatpush1.bf16.msra.mxu0 %v1127
    %2052 = vmatprep.subr.bf16.mxu0 %v1134
    %2053 = vmatpush1.bf16.msra.mxu0 %v1133
    %2054 = vmatprep.subr.bf16.mxu0 %v1140
    %2055 = vmatpush1.bf16.msra.mxu0 %v1139
    %2056 = vmatprep.subr.bf16.mxu0 %v1146
    %2057 = vmatpush1.bf16.msra.mxu0 %v1145
    %2058 = vmatprep.subr.bf16.mxu0 %v1152
    %2059 = vmatpush1.bf16.msra.mxu0 %v1151
    %2060 = vmatprep.subr.bf16.mxu0 %v1158
    %2061 = vmatpush1.bf16.msra.mxu0 %v1157
    %2062 = vmatprep.subr.bf16.mxu0 %v1164
    %2063 = vmatpush1.bf16.msra.mxu0 %v1163
    %2064 = vmatprep.subr.bf16.mxu0 %v1170
    %2065 = vmatpush1.bf16.msra.mxu0 %v1169
    %2066 = vmatprep.subr.bf16.mxu0 %v1176
    %2067 = vmatpush1.bf16.msra.mxu0 %v1175
    %2068 = vmatprep.subr.bf16.mxu0 %v1182
    %2069 = vmatpush1.bf16.msra.mxu0 %v1181
    %2070 = vmatprep.subr.bf16.mxu0 %v1188
    %2071 = vmatpush1.bf16.msra.mxu0 %v1187
    %2072 = vmatprep.subr.bf16.mxu0 %v1194
    %2073 = vmatpush1.bf16.msra.mxu0 %v1193
    %2074 = vmatprep.subr.bf16.mxu0 %v1200
    %2075 = vmatpush1.bf16.msra.mxu0 %v1199
    %2076 = vmatprep.mubr.bf16.mxu0 %v2002
    %2077 = vmatmul.mubr.bf16.gmra.mrb[0].mxu0 %v2001
    %v2078 = vpop.f32.mrb[0].mxu0
    %v2079 = vadd.f32 %v791, %v2078
    %v2080 = vpop.f32.mrb[0].mxu0
    %v2081 = vadd.f32 %v795, %v2080
    %v2082 = vpop.f32.mrb[0].mxu0
    %v2083 = vpop.f32.mrb[0].mxu0
    %2084 = vdwg.mxu0
    %2085 = vmatprep.subr.bf16.mxu0 %v1112
    %2086 = vmatpush1.bf16.msra.mxu0 %v1111
    %2087 = vmatprep.subr.bf16.mxu0 %v1118
    %2088 = vmatpush1.bf16.msra.mxu0 %v1117
    %2089 = vmatprep.subr.bf16.mxu0 %v1124
    %2090 = vmatpush1.bf16.msra.mxu0 %v1123
    %2091 = vmatprep.subr.bf16.mxu0 %v1130
    %2092 = vmatpush1.bf16.msra.mxu0 %v1129
    %2093 = vmatprep.subr.bf16.mxu0 %v1136
    %2094 = vmatpush1.bf16.msra.mxu0 %v1135
    %2095 = vmatprep.subr.bf16.mxu0 %v1142
    %2096 = vmatpush1.bf16.msra.mxu0 %v1141
    %2097 = vmatprep.subr.bf16.mxu0 %v1148
    %2098 = vmatpush1.bf16.msra.mxu0 %v1147
    %2099 = vmatprep.subr.bf16.mxu0 %v1154
    %2100 = vmatpush1.bf16.msra.mxu0 %v1153
    %2101 = vmatprep.subr.bf16.mxu0 %v1160
    %2102 = vmatpush1.bf16.msra.mxu0 %v1159
    %2103 = vmatprep.subr.bf16.mxu0 %v1166
    %2104 = vmatpush1.bf16.msra.mxu0 %v1165
    %2105 = vmatprep.subr.bf16.mxu0 %v1172
    %2106 = vmatpush1.bf16.msra.mxu0 %v1171
    %2107 = vmatprep.subr.bf16.mxu0 %v1178
    %2108 = vmatpush1.bf16.msra.mxu0 %v1177
    %2109 = vmatprep.subr.bf16.mxu0 %v1184
    %2110 = vmatpush1.bf16.msra.mxu0 %v1183
    %2111 = vmatprep.subr.bf16.mxu0 %v1190
    %2112 = vmatpush1.bf16.msra.mxu0 %v1189
    %2113 = vmatprep.subr.bf16.mxu0 %v1196
    %2114 = vmatpush1.bf16.msra.mxu0 %v1195
    %2115 = vmatprep.subr.bf16.mxu0 %v1202
    %2116 = vmatpush1.bf16.msra.mxu0 %v1201
    %2117 = vmatprep.mubr.bf16.mxu0 %v2002
    %2118 = vmatmul.mubr.bf16.gmra.mrb[0].mxu0 %v2001
    %v2119 = vpop.f32.mrb[0].mxu0
    %v2120 = vadd.f32 %v799, %v2119
    %v2121 = vpop.f32.mrb[0].mxu0
    %v2122 = vadd.f32 %v803, %v2121
    %v2123 = vpop.f32.mrb[0].mxu0
    %v2124 = vpop.f32.mrb[0].mxu0
    %2125 = vdwg.mxu0
    %v2126 = vadd.f32 %v1995, %v2038
    %v2127 = vadd.f32 %v1996, %v2040
    %v2128 = vxor.u32 %v2126, 2147483648
    %v2129 = vxor.u32 %v2127, 2147483648
    %v2130 = vmul.f32 %v2128, 1.442695
    %v2131 = vpow.pop %v2130
    %v2132 = vmul.f32 %v2129, 1.442695
    %v2133 = vpow.pop %v2132
    %v2134 = vadd.f32 %v2131, 1.0
    %v2135 = vadd.f32 %v2133, 1.0
    %v2136 = vrcp.pop %v2134
    %v2137 = vmul.f32 1.0, %v2136
    %v2138 = vrcp.pop %v2135
    %v2139 = vmul.f32 1.0, %v2138
    %v2140 = vadd.f32 %v1997, %v2079
    %v2141 = vadd.f32 %v1998, %v2081
    %v2142 = vxor.u32 %v2140, 2147483648
    %v2143 = vxor.u32 %v2141, 2147483648
    %v2144 = vmul.f32 %v2142, 1.442695
    %v2145 = vpow.pop %v2144
    %v2146 = vmul.f32 %v2143, 1.442695
    %v2147 = vpow.pop %v2146
    %v2148 = vadd.f32 %v2145, 1.0
    %v2149 = vadd.f32 %v2147, 1.0
    %v2150 = vrcp.pop %v2148
    %v2151 = vmul.f32 1.0, %v2150
    %v2152 = vrcp.pop %v2149
    %v2153 = vmul.f32 1.0, %v2152
    %v2154 = vmul.f32 %v2137, %v2120
    %v2155 = vmul.f32 %v2139, %v2122
    %v2156 = vadd.f32 %v1999, %v2154
    %v2157 = vadd.f32 %v2000, %v2155
    %v2158 = vtanh.pop %v2156
    %v2159 = vtanh.pop %v2157
    %v2160 = vsub.f32 1.0, %v2151
    %v2161 = vsub.f32 1.0, %v2153
    %v2162 = vmul.f32 %v2160, %v2158
    %v2163 = vmul.f32 %v2161, %v2159
    %v2164 = vmul.f32 %v2151, %v1990
    %v2165 = vmul.f32 %v2153, %v1991
    %v2166 = vadd.f32 %v2162, %v2164
    %v2167 = vadd.f32 %v2163, %v2165
    %s2168 = smul.u32 5, 6
    %s2169 = smul.addr %s2168, 8
    %s2170 = scalar_lea.vmem [#allocation2], %s2169
    %v2171 = vld [vmem:[%s2170] sm:$0xff]
    %v2172 = vld [vmem:[%s2170 + $0x8] sm:$0xff]
    %v2173 = vld [vmem:[%s2170 + $0x10] sm:$0xff]
    %v2174 = vld [vmem:[%s2170 + $0x18] sm:$0xff]
    %v2175 = vld [vmem:[%s2170 + $0x20] sm:$0xff]
    %v2176 = vld [vmem:[%s2170 + $0x28] sm:$0xff]
    %v2177 = vpack.c.bf16 %v2166, %v2166
    %v2178 = vpack.c.bf16 %v2167, %v2167
    %2179 = vmatprep.subr.bf16.mxu0 %v1108
    %2180 = vmatpush1.bf16.msra.mxu0 %v1107
    %2181 = vmatprep.subr.bf16.mxu0 %v1114
    %2182 = vmatpush1.bf16.msra.mxu0 %v1113
    %2183 = vmatprep.subr.bf16.mxu0 %v1120
    %2184 = vmatpush1.bf16.msra.mxu0 %v1119
    %2185 = vmatprep.subr.bf16.mxu0 %v1126
    %2186 = vmatpush1.bf16.msra.mxu0 %v1125
    %2187 = vmatprep.subr.bf16.mxu0 %v1132
    %2188 = vmatpush1.bf16.msra.mxu0 %v1131
    %2189 = vmatprep.subr.bf16.mxu0 %v1138
    %2190 = vmatpush1.bf16.msra.mxu0 %v1137
    %2191 = vmatprep.subr.bf16.mxu0 %v1144
    %2192 = vmatpush1.bf16.msra.mxu0 %v1143
    %2193 = vmatprep.subr.bf16.mxu0 %v1150
    %2194 = vmatpush1.bf16.msra.mxu0 %v1149
    %2195 = vmatprep.subr.bf16.mxu0 %v1156
    %2196 = vmatpush1.bf16.msra.mxu0 %v1155
    %2197 = vmatprep.subr.bf16.mxu0 %v1162
    %2198 = vmatpush1.bf16.msra.mxu0 %v1161
    %2199 = vmatprep.subr.bf16.mxu0 %v1168
    %2200 = vmatpush1.bf16.msra.mxu0 %v1167
    %2201 = vmatprep.subr.bf16.mxu0 %v1174
    %2202 = vmatpush1.bf16.msra.mxu0 %v1173
    %2203 = vmatprep.subr.bf16.mxu0 %v1180
    %2204 = vmatpush1.bf16.msra.mxu0 %v1179
    %2205 = vmatprep.subr.bf16.mxu0 %v1186
    %2206 = vmatpush1.bf16.msra.mxu0 %v1185
    %2207 = vmatprep.subr.bf16.mxu0 %v1192
    %2208 = vmatpush1.bf16.msra.mxu0 %v1191
    %2209 = vmatprep.subr.bf16.mxu0 %v1198
    %2210 = vmatpush1.bf16.msra.mxu0 %v1197
    %2211 = vmatprep.mubr.bf16.mxu0 %v2178
    %2212 = vmatmul.mubr.bf16.gmra.mrb[0].mxu0 %v2177
    %v2213 = vpop.f32.mrb[0].mxu0
    %v2214 = vadd.f32 %v783, %v2213
    %v2215 = vpop.f32.mrb[0].mxu0
    %v2216 = vadd.f32 %v787, %v2215
    %v2217 = vpop.f32.mrb[0].mxu0
    %v2218 = vpop.f32.mrb[0].mxu0
    %2219 = vdwg.mxu0
    %2220 = vmatprep.subr.bf16.mxu0 %v1110
    %2221 = vmatpush1.bf16.msra.mxu0 %v1109
    %2222 = vmatprep.subr.bf16.mxu0 %v1116
    %2223 = vmatpush1.bf16.msra.mxu0 %v1115
    %2224 = vmatprep.subr.bf16.mxu0 %v1122
    %2225 = vmatpush1.bf16.msra.mxu0 %v1121
    %2226 = vmatprep.subr.bf16.mxu0 %v1128
    %2227 = vmatpush1.bf16.msra.mxu0 %v1127
    %2228 = vmatprep.subr.bf16.mxu0 %v1134
    %2229 = vmatpush1.bf16.msra.mxu0 %v1133
    %2230 = vmatprep.subr.bf16.mxu0 %v1140
    %2231 = vmatpush1.bf16.msra.mxu0 %v1139
    %2232 = vmatprep.subr.bf16.mxu0 %v1146
    %2233 = vmatpush1.bf16.msra.mxu0 %v1145
    %2234 = vmatprep.subr.bf16.mxu0 %v1152
    %2235 = vmatpush1.bf16.msra.mxu0 %v1151
    %2236 = vmatprep.subr.bf16.mxu0 %v1158
    %2237 = vmatpush1.bf16.msra.mxu0 %v1157
    %2238 = vmatprep.subr.bf16.mxu0 %v1164
    %2239 = vmatpush1.bf16.msra.mxu0 %v1163
    %2240 = vmatprep.subr.bf16.mxu0 %v1170
    %2241 = vmatpush1.bf16.msra.mxu0 %v1169
    %2242 = vmatprep.subr.bf16.mxu0 %v1176
    %2243 = vmatpush1.bf16.msra.mxu0 %v1175
    %2244 = vmatprep.subr.bf16.mxu0 %v1182
    %2245 = vmatpush1.bf16.msra.mxu0 %v1181
    %2246 = vmatprep.subr.bf16.mxu0 %v1188
    %2247 = vmatpush1.bf16.msra.mxu0 %v1187
    %2248 = vmatprep.subr.bf16.mxu0 %v1194
    %2249 = vmatpush1.bf16.msra.mxu0 %v1193
    %2250 = vmatprep.subr.bf16.mxu0 %v1200
    %2251 = vmatpush1.bf16.msra.mxu0 %v1199
    %2252 = vmatprep.mubr.bf16.mxu0 %v2178
    %2253 = vmatmul.mubr.bf16.gmra.mrb[0].mxu0 %v2177
    %v2254 = vpop.f32.mrb[0].mxu0
    %v2255 = vadd.f32 %v791, %v2254
    %v2256 = vpop.f32.mrb[0].mxu0
    %v2257 = vadd.f32 %v795, %v2256
    %v2258 = vpop.f32.mrb[0].mxu0
    %v2259 = vpop.f32.mrb[0].mxu0
    %2260 = vdwg.mxu0
    %2261 = vmatprep.subr.bf16.mxu0 %v1112
    %2262 = vmatpush1.bf16.msra.mxu0 %v1111
    %2263 = vmatprep.subr.bf16.mxu0 %v1118
    %2264 = vmatpush1.bf16.msra.mxu0 %v1117
    %2265 = vmatprep.subr.bf16.mxu0 %v1124
    %2266 = vmatpush1.bf16.msra.mxu0 %v1123
    %2267 = vmatprep.subr.bf16.mxu0 %v1130
    %2268 = vmatpush1.bf16.msra.mxu0 %v1129
    %2269 = vmatprep.subr.bf16.mxu0 %v1136
    %2270 = vmatpush1.bf16.msra.mxu0 %v1135
    %2271 = vmatprep.subr.bf16.mxu0 %v1142
    %2272 = vmatpush1.bf16.msra.mxu0 %v1141
    %2273 = vmatprep.subr.bf16.mxu0 %v1148
    %2274 = vmatpush1.bf16.msra.mxu0 %v1147
    %2275 = vmatprep.subr.bf16.mxu0 %v1154
    %2276 = vmatpush1.bf16.msra.mxu0 %v1153
    %2277 = vmatprep.subr.bf16.mxu0 %v1160
    %2278 = vmatpush1.bf16.msra.mxu0 %v1159
    %2279 = vmatprep.subr.bf16.mxu0 %v1166
    %2280 = vmatpush1.bf16.msra.mxu0 %v1165
    %2281 = vmatprep.subr.bf16.mxu0 %v1172
    %2282 = vmatpush1.bf16.msra.mxu0 %v1171
    %2283 = vmatprep.subr.bf16.mxu0 %v1178
    %2284 = vmatpush1.bf16.msra.mxu0 %v1177
    %2285 = vmatprep.subr.bf16.mxu0 %v1184
    %2286 = vmatpush1.bf16.msra.mxu0 %v1183
    %2287 = vmatprep.subr.bf16.mxu0 %v1190
    %2288 = vmatpush1.bf16.msra.mxu0 %v1189
    %2289 = vmatprep.subr.bf16.mxu0 %v1196
    %2290 = vmatpush1.bf16.msra.mxu0 %v1195
    %2291 = vmatprep.subr.bf16.mxu0 %v1202
    %2292 = vmatpush1.bf16.msra.mxu0 %v1201
    %2293 = vmatprep.mubr.bf16.mxu0 %v2178
    %2294 = vmatmul.mubr.bf16.gmra.mrb[0].mxu0 %v2177
    %v2295 = vpop.f32.mrb[0].mxu0
    %v2296 = vadd.f32 %v799, %v2295
    %v2297 = vpop.f32.mrb[0].mxu0
    %v2298 = vadd.f32 %v803, %v2297
    %v2299 = vpop.f32.mrb[0].mxu0
    %v2300 = vpop.f32.mrb[0].mxu0
    %2301 = vdwg.mxu0
    %v2302 = vadd.f32 %v2171, %v2214
    %v2303 = vadd.f32 %v2172, %v2216
    %v2304 = vxor.u32 %v2302, 2147483648
    %v2305 = vxor.u32 %v2303, 2147483648
    %v2306 = vmul.f32 %v2304, 1.442695
    %v2307 = vpow.pop %v2306
    %v2308 = vmul.f32 %v2305, 1.442695
    %v2309 = vpow.pop %v2308
    %v2310 = vadd.f32 %v2307, 1.0
    %v2311 = vadd.f32 %v2309, 1.0
    %v2312 = vrcp.pop %v2310
    %v2313 = vmul.f32 1.0, %v2312
    %v2314 = vrcp.pop %v2311
    %v2315 = vmul.f32 1.0, %v2314
    %v2316 = vadd.f32 %v2173, %v2255
    %v2317 = vadd.f32 %v2174, %v2257
    %v2318 = vxor.u32 %v2316, 2147483648
    %v2319 = vxor.u32 %v2317, 2147483648
    %v2320 = vmul.f32 %v2318, 1.442695
    %v2321 = vpow.pop %v2320
    %v2322 = vmul.f32 %v2319, 1.442695
    %v2323 = vpow.pop %v2322
    %v2324 = vadd.f32 %v2321, 1.0
    %v2325 = vadd.f32 %v2323, 1.0
    %v2326 = vrcp.pop %v2324
    %v2327 = vmul.f32 1.0, %v2326
    %v2328 = vrcp.pop %v2325
    %v2329 = vmul.f32 1.0, %v2328
    %v2330 = vmul.f32 %v2313, %v2296
    %v2331 = vmul.f32 %v2315, %v2298
    %v2332 = vadd.f32 %v2175, %v2330
    %v2333 = vadd.f32 %v2176, %v2331
    %v2334 = vtanh.pop %v2332
    %v2335 = vtanh.pop %v2333
    %v2336 = vsub.f32 1.0, %v2327
    %v2337 = vsub.f32 1.0, %v2329
    %v2338 = vmul.f32 %v2336, %v2334
    %v2339 = vmul.f32 %v2337, %v2335
    %v2340 = vmul.f32 %v2327, %v2166
    %v2341 = vmul.f32 %v2329, %v2167
    %v2342 = vadd.f32 %v2338, %v2340
    %v2343 = vadd.f32 %v2339, %v2341
    %s2344 = smul.u32 6, 6
    %s2345 = smul.addr %s2344, 8
    %s2346 = scalar_lea.vmem [#allocation2], %s2345
    %v2347 = vld [vmem:[%s2346] sm:$0xff]
    %v2348 = vld [vmem:[%s2346 + $0x8] sm:$0xff]
    %v2349 = vld [vmem:[%s2346 + $0x10] sm:$0xff]
    %v2350 = vld [vmem:[%s2346 + $0x18] sm:$0xff]
    %v2351 = vld [vmem:[%s2346 + $0x20] sm:$0xff]
    %v2352 = vld [vmem:[%s2346 + $0x28] sm:$0xff]
    %v2353 = vpack.c.bf16 %v2342, %v2342
    %v2354 = vpack.c.bf16 %v2343, %v2343
    %2355 = vmatprep.subr.bf16.mxu0 %v1108
    %2356 = vmatpush1.bf16.msra.mxu0 %v1107
    %2357 = vmatprep.subr.bf16.mxu0 %v1114
    %2358 = vmatpush1.bf16.msra.mxu0 %v1113
    %2359 = vmatprep.subr.bf16.mxu0 %v1120
    %2360 = vmatpush1.bf16.msra.mxu0 %v1119
    %2361 = vmatprep.subr.bf16.mxu0 %v1126
    %2362 = vmatpush1.bf16.msra.mxu0 %v1125
    %2363 = vmatprep.subr.bf16.mxu0 %v1132
    %2364 = vmatpush1.bf16.msra.mxu0 %v1131
    %2365 = vmatprep.subr.bf16.mxu0 %v1138
    %2366 = vmatpush1.bf16.msra.mxu0 %v1137
    %2367 = vmatprep.subr.bf16.mxu0 %v1144
    %2368 = vmatpush1.bf16.msra.mxu0 %v1143
    %2369 = vmatprep.subr.bf16.mxu0 %v1150
    %2370 = vmatpush1.bf16.msra.mxu0 %v1149
    %2371 = vmatprep.subr.bf16.mxu0 %v1156
    %2372 = vmatpush1.bf16.msra.mxu0 %v1155
    %2373 = vmatprep.subr.bf16.mxu0 %v1162
    %2374 = vmatpush1.bf16.msra.mxu0 %v1161
    %2375 = vmatprep.subr.bf16.mxu0 %v1168
    %2376 = vmatpush1.bf16.msra.mxu0 %v1167
    %2377 = vmatprep.subr.bf16.mxu0 %v1174
    %2378 = vmatpush1.bf16.msra.mxu0 %v1173
    %2379 = vmatprep.subr.bf16.mxu0 %v1180
    %2380 = vmatpush1.bf16.msra.mxu0 %v1179
    %2381 = vmatprep.subr.bf16.mxu0 %v1186
    %2382 = vmatpush1.bf16.msra.mxu0 %v1185
    %2383 = vmatprep.subr.bf16.mxu0 %v1192
    %2384 = vmatpush1.bf16.msra.mxu0 %v1191
    %2385 = vmatprep.subr.bf16.mxu0 %v1198
    %2386 = vmatpush1.bf16.msra.mxu0 %v1197
    %2387 = vmatprep.mubr.bf16.mxu0 %v2354
    %2388 = vmatmul.mubr.bf16.gmra.mrb[0].mxu0 %v2353
    %v2389 = vpop.f32.mrb[0].mxu0
    %v2390 = vadd.f32 %v783, %v2389
    %v2391 = vpop.f32.mrb[0].mxu0
    %v2392 = vadd.f32 %v787, %v2391
    %v2393 = vpop.f32.mrb[0].mxu0
    %v2394 = vpop.f32.mrb[0].mxu0
    %2395 = vdwg.mxu0
    %2396 = vmatprep.subr.bf16.mxu0 %v1110
    %2397 = vmatpush1.bf16.msra.mxu0 %v1109
    %2398 = vmatprep.subr.bf16.mxu0 %v1116
    %2399 = vmatpush1.bf16.msra.mxu0 %v1115
    %2400 = vmatprep.subr.bf16.mxu0 %v1122
    %2401 = vmatpush1.bf16.msra.mxu0 %v1121
    %2402 = vmatprep.subr.bf16.mxu0 %v1128
    %2403 = vmatpush1.bf16.msra.mxu0 %v1127
    %2404 = vmatprep.subr.bf16.mxu0 %v1134
    %2405 = vmatpush1.bf16.msra.mxu0 %v1133
    %2406 = vmatprep.subr.bf16.mxu0 %v1140
    %2407 = vmatpush1.bf16.msra.mxu0 %v1139
    %2408 = vmatprep.subr.bf16.mxu0 %v1146
    %2409 = vmatpush1.bf16.msra.mxu0 %v1145
    %2410 = vmatprep.subr.bf16.mxu0 %v1152
    %2411 = vmatpush1.bf16.msra.mxu0 %v1151
    %2412 = vmatprep.subr.bf16.mxu0 %v1158
    %2413 = vmatpush1.bf16.msra.mxu0 %v1157
    %2414 = vmatprep.subr.bf16.mxu0 %v1164
    %2415 = vmatpush1.bf16.msra.mxu0 %v1163
    %2416 = vmatprep.subr.bf16.mxu0 %v1170
    %2417 = vmatpush1.bf16.msra.mxu0 %v1169
    %2418 = vmatprep.subr.bf16.mxu0 %v1176
    %2419 = vmatpush1.bf16.msra.mxu0 %v1175
    %2420 = vmatprep.subr.bf16.mxu0 %v1182
    %2421 = vmatpush1.bf16.msra.mxu0 %v1181
    %2422 = vmatprep.subr.bf16.mxu0 %v1188
    %2423 = vmatpush1.bf16.msra.mxu0 %v1187
    %2424 = vmatprep.subr.bf16.mxu0 %v1194
    %2425 = vmatpush1.bf16.msra.mxu0 %v1193
    %2426 = vmatprep.subr.bf16.mxu0 %v1200
    %2427 = vmatpush1.bf16.msra.mxu0 %v1199
    %2428 = vmatprep.mubr.bf16.mxu0 %v2354
    %2429 = vmatmul.mubr.bf16.gmra.mrb[0].mxu0 %v2353
    %v2430 = vpop.f32.mrb[0].mxu0
    %v2431 = vadd.f32 %v791, %v2430
    %v2432 = vpop.f32.mrb[0].mxu0
    %v2433 = vadd.f32 %v795, %v2432
    %v2434 = vpop.f32.mrb[0].mxu0
    %v2435 = vpop.f32.mrb[0].mxu0
    %2436 = vdwg.mxu0
    %2437 = vmatprep.subr.bf16.mxu0 %v1112
    %2438 = vmatpush1.bf16.msra.mxu0 %v1111
    %2439 = vmatprep.subr.bf16.mxu0 %v1118
    %2440 = vmatpush1.bf16.msra.mxu0 %v1117
    %2441 = vmatprep.subr.bf16.mxu0 %v1124
    %2442 = vmatpush1.bf16.msra.mxu0 %v1123
    %2443 = vmatprep.subr.bf16.mxu0 %v1130
    %2444 = vmatpush1.bf16.msra.mxu0 %v1129
    %2445 = vmatprep.subr.bf16.mxu0 %v1136
    %2446 = vmatpush1.bf16.msra.mxu0 %v1135
    %2447 = vmatprep.subr.bf16.mxu0 %v1142
    %2448 = vmatpush1.bf16.msra.mxu0 %v1141
    %2449 = vmatprep.subr.bf16.mxu0 %v1148
    %2450 = vmatpush1.bf16.msra.mxu0 %v1147
    %2451 = vmatprep.subr.bf16.mxu0 %v1154
    %2452 = vmatpush1.bf16.msra.mxu0 %v1153
    %2453 = vmatprep.subr.bf16.mxu0 %v1160
    %2454 = vmatpush1.bf16.msra.mxu0 %v1159
    %2455 = vmatprep.subr.bf16.mxu0 %v1166
    %2456 = vmatpush1.bf16.msra.mxu0 %v1165
    %2457 = vmatprep.subr.bf16.mxu0 %v1172
    %2458 = vmatpush1.bf16.msra.mxu0 %v1171
    %2459 = vmatprep.subr.bf16.mxu0 %v1178
    %2460 = vmatpush1.bf16.msra.mxu0 %v1177
    %2461 = vmatprep.subr.bf16.mxu0 %v1184
    %2462 = vmatpush1.bf16.msra.mxu0 %v1183
    %2463 = vmatprep.subr.bf16.mxu0 %v1190
    %2464 = vmatpush1.bf16.msra.mxu0 %v1189
    %2465 = vmatprep.subr.bf16.mxu0 %v1196
    %2466 = vmatpush1.bf16.msra.mxu0 %v1195
    %2467 = vmatprep.subr.bf16.mxu0 %v1202
    %2468 = vmatpush1.bf16.msra.mxu0 %v1201
    %2469 = vmatprep.mubr.bf16.mxu0 %v2354
    %2470 = vmatmul.mubr.bf16.gmra.mrb[0].mxu0 %v2353
    %v2471 = vpop.f32.mrb[0].mxu0
    %v2472 = vadd.f32 %v799, %v2471
    %v2473 = vpop.f32.mrb[0].mxu0
    %v2474 = vadd.f32 %v803, %v2473
    %v2475 = vpop.f32.mrb[0].mxu0
    %v2476 = vpop.f32.mrb[0].mxu0
    %2477 = vdwg.mxu0
    %v2478 = vadd.f32 %v2347, %v2390
    %v2479 = vadd.f32 %v2348, %v2392
    %v2480 = vxor.u32 %v2478, 2147483648
    %v2481 = vxor.u32 %v2479, 2147483648
    %v2482 = vmul.f32 %v2480, 1.442695
    %v2483 = vpow.pop %v2482
    %v2484 = vmul.f32 %v2481, 1.442695
    %v2485 = vpow.pop %v2484
    %v2486 = vadd.f32 %v2483, 1.0
    %v2487 = vadd.f32 %v2485, 1.0
    %v2488 = vrcp.pop %v2486
    %v2489 = vmul.f32 1.0, %v2488
    %v2490 = vrcp.pop %v2487
    %v2491 = vmul.f32 1.0, %v2490
    %v2492 = vadd.f32 %v2349, %v2431
    %v2493 = vadd.f32 %v2350, %v2433
    %v2494 = vxor.u32 %v2492, 2147483648
    %v2495 = vxor.u32 %v2493, 2147483648
    %v2496 = vmul.f32 %v2494, 1.442695
    %v2497 = vpow.pop %v2496
    %v2498 = vmul.f32 %v2495, 1.442695
    %v2499 = vpow.pop %v2498
    %v2500 = vadd.f32 %v2497, 1.0
    %v2501 = vadd.f32 %v2499, 1.0
    %v2502 = vrcp.pop %v2500
    %v2503 = vmul.f32 1.0, %v2502
    %v2504 = vrcp.pop %v2501
    %v2505 = vmul.f32 1.0, %v2504
    %v2506 = vmul.f32 %v2489, %v2472
    %v2507 = vmul.f32 %v2491, %v2474
    %v2508 = vadd.f32 %v2351, %v2506
    %v2509 = vadd.f32 %v2352, %v2507
    %v2510 = vtanh.pop %v2508
    %v2511 = vtanh.pop %v2509
    %v2512 = vsub.f32 1.0, %v2503
    %v2513 = vsub.f32 1.0, %v2505
    %v2514 = vmul.f32 %v2512, %v2510
    %v2515 = vmul.f32 %v2513, %v2511
    %v2516 = vmul.f32 %v2503, %v2342
    %v2517 = vmul.f32 %v2505, %v2343
    %v2518 = vadd.f32 %v2514, %v2516
    %v2519 = vadd.f32 %v2515, %v2517
    %s2520 = smul.u32 7, 6
    %s2521 = smul.addr %s2520, 8
    %s2522 = scalar_lea.vmem [#allocation2], %s2521
    %v2523 = vld [vmem:[%s2522] sm:$0xff]
    %v2524 = vld [vmem:[%s2522 + $0x8] sm:$0xff]
    %v2525 = vld [vmem:[%s2522 + $0x10] sm:$0xff]
    %v2526 = vld [vmem:[%s2522 + $0x18] sm:$0xff]
    %v2527 = vld [vmem:[%s2522 + $0x20] sm:$0xff]
    %v2528 = vld [vmem:[%s2522 + $0x28] sm:$0xff]
    %v2529 = vpack.c.bf16 %v2518, %v2518
    %v2530 = vpack.c.bf16 %v2519, %v2519
    %2531 = vmatprep.subr.bf16.mxu0 %v1108
    %2532 = vmatpush1.bf16.msra.mxu0 %v1107
    %2533 = vmatprep.subr.bf16.mxu0 %v1114
    %2534 = vmatpush1.bf16.msra.mxu0 %v1113
    %2535 = vmatprep.subr.bf16.mxu0 %v1120
    %2536 = vmatpush1.bf16.msra.mxu0 %v1119
    %2537 = vmatprep.subr.bf16.mxu0 %v1126
    %2538 = vmatpush1.bf16.msra.mxu0 %v1125
    %2539 = vmatprep.subr.bf16.mxu0 %v1132
    %2540 = vmatpush1.bf16.msra.mxu0 %v1131
    %2541 = vmatprep.subr.bf16.mxu0 %v1138
    %2542 = vmatpush1.bf16.msra.mxu0 %v1137
    %2543 = vmatprep.subr.bf16.mxu0 %v1144
    %2544 = vmatpush1.bf16.msra.mxu0 %v1143
    %2545 = vmatprep.subr.bf16.mxu0 %v1150
    %2546 = vmatpush1.bf16.msra.mxu0 %v1149
    %2547 = vmatprep.subr.bf16.mxu0 %v1156
    %2548 = vmatpush1.bf16.msra.mxu0 %v1155
    %2549 = vmatprep.subr.bf16.mxu0 %v1162
    %2550 = vmatpush1.bf16.msra.mxu0 %v1161
    %2551 = vmatprep.subr.bf16.mxu0 %v1168
    %2552 = vmatpush1.bf16.msra.mxu0 %v1167
    %2553 = vmatprep.subr.bf16.mxu0 %v1174
    %2554 = vmatpush1.bf16.msra.mxu0 %v1173
    %2555 = vmatprep.subr.bf16.mxu0 %v1180
    %2556 = vmatpush1.bf16.msra.mxu0 %v1179
    %2557 = vmatprep.subr.bf16.mxu0 %v1186
    %2558 = vmatpush1.bf16.msra.mxu0 %v1185
    %2559 = vmatprep.subr.bf16.mxu0 %v1192
    %2560 = vmatpush1.bf16.msra.mxu0 %v1191
    %2561 = vmatprep.subr.bf16.mxu0 %v1198
    %2562 = vmatpush1.bf16.msra.mxu0 %v1197
    %2563 = vmatprep.mubr.bf16.mxu0 %v2530
    %2564 = vmatmul.mubr.bf16.gmra.mrb[0].mxu0 %v2529
    %v2565 = vpop.f32.mrb[0].mxu0
    %v2566 = vadd.f32 %v783, %v2565
    %v2567 = vpop.f32.mrb[0].mxu0
    %v2568 = vadd.f32 %v787, %v2567
    %v2569 = vpop.f32.mrb[0].mxu0
    %v2570 = vpop.f32.mrb[0].mxu0
    %2571 = vdwg.mxu0
    %2572 = vmatprep.subr.bf16.mxu0 %v1110
    %2573 = vmatpush1.bf16.msra.mxu0 %v1109
    %2574 = vmatprep.subr.bf16.mxu0 %v1116
    %2575 = vmatpush1.bf16.msra.mxu0 %v1115
    %2576 = vmatprep.subr.bf16.mxu0 %v1122
    %2577 = vmatpush1.bf16.msra.mxu0 %v1121
    %2578 = vmatprep.subr.bf16.mxu0 %v1128
    %2579 = vmatpush1.bf16.msra.mxu0 %v1127
    %2580 = vmatprep.subr.bf16.mxu0 %v1134
    %2581 = vmatpush1.bf16.msra.mxu0 %v1133
    %2582 = vmatprep.subr.bf16.mxu0 %v1140
    %2583 = vmatpush1.bf16.msra.mxu0 %v1139
    %2584 = vmatprep.subr.bf16.mxu0 %v1146
    %2585 = vmatpush1.bf16.msra.mxu0 %v1145
    %2586 = vmatprep.subr.bf16.mxu0 %v1152
    %2587 = vmatpush1.bf16.msra.mxu0 %v1151
    %2588 = vmatprep.subr.bf16.mxu0 %v1158
    %2589 = vmatpush1.bf16.msra.mxu0 %v1157
    %2590 = vmatprep.subr.bf16.mxu0 %v1164
    %2591 = vmatpush1.bf16.msra.mxu0 %v1163
    %2592 = vmatprep.subr.bf16.mxu0 %v1170
    %2593 = vmatpush1.bf16.msra.mxu0 %v1169
    %2594 = vmatprep.subr.bf16.mxu0 %v1176
    %2595 = vmatpush1.bf16.msra.mxu0 %v1175
    %2596 = vmatprep.subr.bf16.mxu0 %v1182
    %2597 = vmatpush1.bf16.msra.mxu0 %v1181
    %2598 = vmatprep.subr.bf16.mxu0 %v1188
    %2599 = vmatpush1.bf16.msra.mxu0 %v1187
    %2600 = vmatprep.subr.bf16.mxu0 %v1194
    %2601 = vmatpush1.bf16.msra.mxu0 %v1193
    %2602 = vmatprep.subr.bf16.mxu0 %v1200
    %2603 = vmatpush1.bf16.msra.mxu0 %v1199
    %2604 = vmatprep.mubr.bf16.mxu0 %v2530
    %2605 = vmatmul.mubr.bf16.gmra.mrb[0].mxu0 %v2529
    %v2606 = vpop.f32.mrb[0].mxu0
    %v2607 = vadd.f32 %v791, %v2606
    %v2608 = vpop.f32.mrb[0].mxu0
    %v2609 = vadd.f32 %v795, %v2608
    %v2610 = vpop.f32.mrb[0].mxu0
    %v2611 = vpop.f32.mrb[0].mxu0
    %2612 = vdwg.mxu0
    %2613 = vmatprep.subr.bf16.mxu0 %v1112
    %2614 = vmatpush1.bf16.msra.mxu0 %v1111
    %2615 = vmatprep.subr.bf16.mxu0 %v1118
    %2616 = vmatpush1.bf16.msra.mxu0 %v1117
    %2617 = vmatprep.subr.bf16.mxu0 %v1124
    %2618 = vmatpush1.bf16.msra.mxu0 %v1123
    %2619 = vmatprep.subr.bf16.mxu0 %v1130
    %2620 = vmatpush1.bf16.msra.mxu0 %v1129
    %2621 = vmatprep.subr.bf16.mxu0 %v1136
    %2622 = vmatpush1.bf16.msra.mxu0 %v1135
    %2623 = vmatprep.subr.bf16.mxu0 %v1142
    %2624 = vmatpush1.bf16.msra.mxu0 %v1141
    %2625 = vmatprep.subr.bf16.mxu0 %v1148
    %2626 = vmatpush1.bf16.msra.mxu0 %v1147
    %2627 = vmatprep.subr.bf16.mxu0 %v1154
    %2628 = vmatpush1.bf16.msra.mxu0 %v1153
    %2629 = vmatprep.subr.bf16.mxu0 %v1160
    %2630 = vmatpush1.bf16.msra.mxu0 %v1159
    %2631 = vmatprep.subr.bf16.mxu0 %v1166
    %2632 = vmatpush1.bf16.msra.mxu0 %v1165
    %2633 = vmatprep.subr.bf16.mxu0 %v1172
    %2634 = vmatpush1.bf16.msra.mxu0 %v1171
    %2635 = vmatprep.subr.bf16.mxu0 %v1178
    %2636 = vmatpush1.bf16.msra.mxu0 %v1177
    %2637 = vmatprep.subr.bf16.mxu0 %v1184
    %2638 = vmatpush1.bf16.msra.mxu0 %v1183
    %2639 = vmatprep.subr.bf16.mxu0 %v1190
    %2640 = vmatpush1.bf16.msra.mxu0 %v1189
    %2641 = vmatprep.subr.bf16.mxu0 %v1196
    %2642 = vmatpush1.bf16.msra.mxu0 %v1195
    %2643 = vmatprep.subr.bf16.mxu0 %v1202
    %2644 = vmatpush1.bf16.msra.mxu0 %v1201
    %2645 = vmatprep.mubr.bf16.mxu0 %v2530
    %2646 = vmatmul.mubr.bf16.gmra.mrb[0].mxu0 %v2529
    %v2647 = vpop.f32.mrb[0].mxu0
    %v2648 = vadd.f32 %v799, %v2647
    %v2649 = vpop.f32.mrb[0].mxu0
    %v2650 = vadd.f32 %v803, %v2649
    %v2651 = vpop.f32.mrb[0].mxu0
    %v2652 = vpop.f32.mrb[0].mxu0
    %2653 = vdwg.mxu0
    %v2654 = vadd.f32 %v2523, %v2566
    %v2655 = vadd.f32 %v2524, %v2568
    %v2656 = vxor.u32 %v2654, 2147483648
    %v2657 = vxor.u32 %v2655, 2147483648
    %v2658 = vmul.f32 %v2656, 1.442695
    %v2659 = vpow.pop %v2658
    %v2660 = vmul.f32 %v2657, 1.442695
    %v2661 = vpow.pop %v2660
    %v2662 = vadd.f32 %v2659, 1.0
    %v2663 = vadd.f32 %v2661, 1.0
    %v2664 = vrcp.pop %v2662
    %v2665 = vmul.f32 1.0, %v2664
    %v2666 = vrcp.pop %v2663
    %v2667 = vmul.f32 1.0, %v2666
    %v2668 = vadd.f32 %v2525, %v2607
    %v2669 = vadd.f32 %v2526, %v2609
    %v2670 = vxor.u32 %v2668, 2147483648
    %v2671 = vxor.u32 %v2669, 2147483648
    %v2672 = vmul.f32 %v2670, 1.442695
    %v2673 = vpow.pop %v2672
    %v2674 = vmul.f32 %v2671, 1.442695
    %v2675 = vpow.pop %v2674
    %v2676 = vadd.f32 %v2673, 1.0
    %v2677 = vadd.f32 %v2675, 1.0
    %v2678 = vrcp.pop %v2676
    %v2679 = vmul.f32 1.0, %v2678
    %v2680 = vrcp.pop %v2677
    %v2681 = vmul.f32 1.0, %v2680
    %v2682 = vmul.f32 %v2665, %v2648
    %v2683 = vmul.f32 %v2667, %v2650
    %v2684 = vadd.f32 %v2527, %v2682
    %v2685 = vadd.f32 %v2528, %v2683
    %v2686 = vtanh.pop %v2684
    %v2687 = vtanh.pop %v2685
    %v2688 = vsub.f32 1.0, %v2679
    %v2689 = vsub.f32 1.0, %v2681
    %v2690 = vmul.f32 %v2688, %v2686
    %v2691 = vmul.f32 %v2689, %v2687
    %v2692 = vmul.f32 %v2679, %v2518
    %v2693 = vmul.f32 %v2681, %v2519
    %v2694 = vadd.f32 %v2690, %v2692
    %v2695 = vadd.f32 %v2691, %v2693
    %2696 = vst [vmem:[#allocation9] sm:$0xff] %v2694
    %2697 = vst [vmem:[#allocation9 + $0x8] sm:$0xff] %v2695
    // Predicated region
    $region34: #{tpu_custom_call.1} parent=1 // pred_check
      _
    $region35: #{tpu_custom_call.1} parent=1 // pred_check_branch
      %2699 = sbr.rel (0) target = $region37
    $region36: #{tpu_custom_call.1} parent=1 // pred_region
      %s2701 = ssub.s32 256, 256
      %2702 = vsyncadd [#allocation5], %s2701
      %s2704 = sshll.u32 [#allocation9], 4
      %s2705 = int_to_ptr.vmem [resolvable:$true] %s2704
      %2707 = dma.vmem_to_hbm [thread:$0]  %s2705, 256, %s5, [#allocation5]
    $region37: #{tpu_custom_call.1} parent=1 // pred_fallthru
      _
    // Predicated region
    $region38: #{tpu_custom_call.1} parent=1 // pred_check
      _
    $region39: #{tpu_custom_call.1} parent=1 // pred_check_branch
      %2709 = sbr.rel (0) target = $region41
    $region40: #{tpu_custom_call.1} parent=1 // pred_region
      %2710 = dma.done [#allocation5], 256
    $region41: #{tpu_custom_call.1} parent=1 // pred_fallthru
      _
    %2711 = vsyncpa [#allocation4], 1
    %2712 = vsyncpa [#allocation7], 1
    %2713 = vsyncpa [#allocation5], 1

</llo_original>
